<compile_context>
chip_gen: v7x
topology: tpu7x:2x2x1
jax: 0.10.0
libtpu: 0.0.40
codegen_flags: <defaults>
</compile_context>

<pallas_src>
import functools
import math

import jax
import jax.numpy as jnp
from jax import lax
from jax.experimental import pallas as pl
from jax.experimental.pallas import tpu as pltpu

HIDDEN = 256


def _round_up(x, m):
    return (x + m - 1) // m * m


def _largest_divisor(n, cap):
    for d in range(min(cap, n), 0, -1):
        if n % d == 0:
            return d
    return 1


# ----------------------------------------------------------------------------
# Pallas kernels
# ----------------------------------------------------------------------------
def _bilstm_chunk_kernel(gxf_ref, gxb_ref, whhf_ref, whhb_ref,
                         outf_ref, outb_ref,
                         hf, cf, hb, cb):
    """Fused fwd+bwd LSTM recurrence over one time-chunk.

    gxf/gxb: (T, Np, 4H) precomputed x @ W_ih + b for fwd / bwd direction
             (bwd block is already reverse-indexed by the BlockSpec).
    whhf/whhb: (H, 4H) bf16 recurrent weights.
    outf/outb: (T, Np, H) hidden outputs per direction.
    hf/cf/hb/cb: (Np, H) f32 carried state in VMEM scratch.
    """
    c = pl.program_id(0)

    @pl.when(c == 0)
    def _():
        hf[...] = jnp.zeros_like(hf)
        cf[...] = jnp.zeros_like(cf)
        hb[...] = jnp.zeros_like(hb)
        cb[...] = jnp.zeros_like(cb)

    T = gxf_ref.shape[0]
    H = hf.shape[-1]

    def cell(gx, h_prev, c_prev, w_ref):
        # gx: (Np, 4H) f32; recurrent matmul in bf16 operands, f32 accumulate.
        gates = gx + jnp.dot(h_prev.astype(jnp.bfloat16), w_ref[...],
                             preferred_element_type=jnp.float32)
        i_g = jax.nn.sigmoid(gates[:, 0 * H:1 * H])
        f_g = jax.nn.sigmoid(gates[:, 1 * H:2 * H])
        g_g = jnp.tanh(gates[:, 2 * H:3 * H])
        o_g = jax.nn.sigmoid(gates[:, 3 * H:4 * H])
        c_new = f_g * c_prev + i_g * g_g
        h_new = o_g * jnp.tanh(c_new)
        return h_new, c_new

    def step(i, carry):
        # forward direction: local time i
        h_new, c_new = cell(gxf_ref[i], hf[...], cf[...], whhf_ref)
        hf[...] = h_new
        cf[...] = c_new
        outf_ref[i] = h_new.astype(outf_ref.dtype)

        # backward direction: local time T-1-i (its block index runs backwards)
        j = T - 1 - i
        hb_new, cb_new = cell(gxb_ref[j], hb[...], cb[...], whhb_ref)
        hb[...] = hb_new
        cb[...] = cb_new
        outb_ref[j] = hb_new.astype(outb_ref.dtype)
        return carry

    lax.fori_loop(0, T, step, 0)


def _fc_logsoftmax_kernel(xf_ref, xb_ref, wf_ref, wb_ref, b_ref, o_ref):
    """Linear(concat(fwd,bwd)) + LogSoftmax over a lane-dense padded vocab.

    Padded vocab columns carry bias = -1e30 so they contribute ~0 to the
    normalizer and are sliced off in the wrapper.
    """
    logits = (jnp.dot(xf_ref[...], wf_ref[...], preferred_element_type=jnp.float32)
              + jnp.dot(xb_ref[...], wb_ref[...], preferred_element_type=jnp.float32)
              + b_ref[...])
    m = jnp.max(logits, axis=-1, keepdims=True)
    z = logits - m
    lse = jnp.log(jnp.sum(jnp.exp(z), axis=-1, keepdims=True))
    o_ref[...] = (z - lse).astype(o_ref.dtype)


# ----------------------------------------------------------------------------
# Wrappers
# ----------------------------------------------------------------------------
def _input_proj(parts, wih, b):
    """Hoisted input projection: (sum_k parts[k] @ wih[rows_k]) + b.

    parts: list of (L, Np, Dk) f32 arrays whose feature-concat is the layer
           input; wih: (sum Dk, 4H) bf16; b: (1, 4H) f32.
    Returns (L, Np, 4H) f32.  One big matmul -> fills the MXU, instead of L
    tiny per-step matmuls inside the recurrence.
    """
    L, Np, _ = parts[0].shape
    acc = None
    off = 0
    for p in parts:
        d = p.shape[-1]
        g = jnp.dot(p.reshape(L * Np, d).astype(jnp.bfloat16),
                    wih[off:off + d],
                    preferred_element_type=jnp.float32)
        acc = g if acc is None else acc + g
        off += d
    return (acc + b).reshape(L, Np, -1)


def bilstm_layer(parts, lp):
    """Bidirectional LSTM layer. parts: list of (L, Np, Dk) -> (fwd, bwd) each (L, Np, H)."""
    L, Np, _ = parts[0].shape
    H = HIDDEN

    gx_f = _input_proj(parts, lp["wih_f"], lp["b_f"])   # (L, Np, 4H) f32
    gx_b = _input_proj(parts, lp["wih_b"], lp["b_b"])   # (L, Np, 4H) f32

    T = _largest_divisor(L, 64)      # time-chunk size (VMEM-friendly)
    nc = L // T

    out_f, out_b = pl.pallas_call(
        _bilstm_chunk_kernel,
        out_shape=(jax.ShapeDtypeStruct((L, Np, H), jnp.float32),
                   jax.ShapeDtypeStruct((L, Np, H), jnp.float32)),
        grid_spec=pltpu.PrefetchScalarGridSpec(
            num_scalar_prefetch=0,
            grid=(nc,),
            in_specs=[
                pl.BlockSpec((T, Np, 4 * H), lambda c: (c, 0, 0)),
                pl.BlockSpec((T, Np, 4 * H), lambda c: (nc - 1 - c, 0, 0)),
                pl.BlockSpec((H, 4 * H), lambda c: (0, 0)),
                pl.BlockSpec((H, 4 * H), lambda c: (0, 0)),
            ],
            out_specs=[
                pl.BlockSpec((T, Np, H), lambda c: (c, 0, 0)),
                pl.BlockSpec((T, Np, H), lambda c: (nc - 1 - c, 0, 0)),
            ],
            scratch_shapes=[
                pltpu.VMEM((Np, H), jnp.float32),   # h fwd
                pltpu.VMEM((Np, H), jnp.float32),   # c fwd
                pltpu.VMEM((Np, H), jnp.float32),   # h bwd
                pltpu.VMEM((Np, H), jnp.float32),   # c bwd
            ],
        ),
        compiler_params=pltpu.CompilerParams(
            dimension_semantics=("arbitrary",)),    # sequential recurrence
    )(gx_f, gx_b, lp["whh_f"], lp["whh_b"])
    return out_f, out_b


def fc_logsoftmax(hf, hb, wf, wb, b):
    """hf/hb: (L, Np, H) -> (L*Np, V1pad) log-probabilities (padded cols invalid)."""
    L, Np, H = hf.shape
    M = L * Np
    V1p = wf.shape[1]

    xf = hf.reshape(M, H).astype(jnp.bfloat16)
    xb = hb.reshape(M, H).astype(jnp.bfloat16)

    TM = 256 if M >= 256 else M
    M_pad = _round_up(M, TM)
    if M_pad != M:
        xf = jnp.pad(xf, ((0, M_pad - M), (0, 0)))
        xb = jnp.pad(xb, ((0, M_pad - M), (0, 0)))

    out = pl.pallas_call(
        _fc_logsoftmax_kernel,
        out_shape=jax.ShapeDtypeStruct((M_pad, V1p), jnp.float32),
        grid_spec=pltpu.PrefetchScalarGridSpec(
            num_scalar_prefetch=0,
            grid=(M_pad // TM,),
            in_specs=[
                pl.BlockSpec((TM, H), lambda i: (i, 0)),
                pl.BlockSpec((TM, H), lambda i: (i, 0)),
                pl.BlockSpec((H, V1p), lambda i: (0, 0)),
                pl.BlockSpec((H, V1p), lambda i: (0, 0)),
                pl.BlockSpec((1, V1p), lambda i: (0, 0)),
            ],
            out_specs=pl.BlockSpec((TM, V1p), lambda i: (i, 0)),
        ),
        compiler_params=pltpu.CompilerParams(
            dimension_semantics=("parallel",)),
    )(xf, xb, wf, wb, b)
    return out[:M]


def brnn_forward(x_bf, params, vocab_size):
    """x_bf: batch-first (N, L, input_size) -> (N, L, vocab_size + 1)."""
    N, L, _ = x_bf.shape
    V1 = vocab_size + 1
    Np = _round_up(N, 8)                               # pad batch to 8 sublanes

    x_tm = jnp.transpose(x_bf, (1, 0, 2))              # time-major (L, N, D)
    if Np != N:
        x_tm = jnp.pad(x_tm, ((0, 0), (0, Np - N), (0, 0)))

    h1f, h1b = bilstm_layer([x_tm], params["layer0"])
    # TODO(synk): training-mode inter-layer dropout (p=0.2) not implemented (inference).
    h2f, h2b = bilstm_layer([h1f, h1b], params["layer1"])

    y = fc_logsoftmax(h2f, h2b, params["fc_wf"], params["fc_wb"], params["fc_b"])
    V1p = y.shape[-1]
    y = y.reshape(L, Np, V1p)[:, :N, :V1]              # small slice/transpose only
    return jnp.transpose(y, (1, 0, 2))                 # (N, L, V1)


# ----------------------------------------------------------------------------
# Deterministic parameter init (PyTorch-style uniform(-1/sqrt(H), 1/sqrt(H)))
# ----------------------------------------------------------------------------
def _uniform(key, shape, bound):
    return jax.random.uniform(key, shape, jnp.float32, -bound, bound)


def init_params(key, input_size, vocab_size):
    bound = 1.0 / math.sqrt(HIDDEN)
    keys = iter(jax.random.split(key, 64))

    def lstm_dir(d_in):
        w_ih = _uniform(next(keys), (4 * HIDDEN, d_in), bound)
        w_hh = _uniform(next(keys), (4 * HIDDEN, HIDDEN), bound)
        b_ih = _uniform(next(keys), (4 * HIDDEN,), bound)
        b_hh = _uniform(next(keys), (4 * HIDDEN,), bound)
        return (w_ih.T.astype(jnp.bfloat16),            # (d_in, 4H) bf16
                w_hh.T.astype(jnp.bfloat16),            # (H, 4H)    bf16
                (b_ih + b_hh).reshape(1, 4 * HIDDEN))   # f32

    params = {}
    for name, d_in in (("layer0", input_size), ("layer1", 2 * HIDDEN)):
        wih_f, whh_f, b_f = lstm_dir(d_in)
        wih_b, whh_b, b_b = lstm_dir(d_in)
        params[name] = dict(wih_f=wih_f, whh_f=whh_f, b_f=b_f,
                            wih_b=wih_b, whh_b=whh_b, b_b=b_b)

    V1 = vocab_size + 1
    V1p = _round_up(V1, 128)                            # lane-dense FC output
    fc_bound = 1.0 / math.sqrt(2 * HIDDEN)
    fc_w = _uniform(next(keys), (V1, 2 * HIDDEN), fc_bound)
    fc_b = _uniform(next(keys), (V1,), fc_bound)
    w_t = jnp.pad(fc_w.T, ((0, 0), (0, V1p - V1)))      # (2H, V1p), zero-pad cols
    params["fc_wf"] = w_t[:HIDDEN].astype(jnp.bfloat16)
    params["fc_wb"] = w_t[HIDDEN:].astype(jnp.bfloat16)
    b_pad = jnp.full((V1p,), -1e30, jnp.float32).at[:V1].set(fc_b)
    params["fc_b"] = b_pad.reshape(1, V1p)
    return params


if __name__ == "__main__":
    N, L, INPUT_SIZE, VOCAB = 2, 8, 16, 10

    key = jax.random.PRNGKey(0)
    k_x, k_p = jax.random.split(key)
    x = jax.random.normal(k_x, (N, L, INPUT_SIZE), jnp.float32)
    params = init_params(k_p, INPUT_SIZE, VOCAB)

    fwd = jax.jit(functools.partial(brnn_forward, params=params, vocab_size=VOCAB))
    out = fwd(x)
    jax.block_until_ready(out)

    assert out.shape == (N, L, VOCAB + 1), out.shape
    # log-softmax rows should exponentiate-sum to 1
    assert jnp.allclose(jnp.sum(jnp.exp(out), axis=-1), 1.0, atol=1e-3)
    print("KERNEL_OK")
</pallas_src>

<mosaic_0001>
module attributes {stable_mosaic.version = 11 : i64} {
  func.func @_bilstm_chunk_kernel(%arg0: i32, %arg1: memref<8x8x1024xf32, #tpu.memory_space<vmem>>, %arg2: memref<8x8x1024xf32, #tpu.memory_space<vmem>>, %arg3: memref<256x1024xbf16, #tpu.memory_space<vmem>>, %arg4: memref<256x1024xbf16, #tpu.memory_space<vmem>>, %arg5: memref<8x8x256xf32, #tpu.memory_space<vmem>>, %arg6: memref<8x8x256xf32, #tpu.memory_space<vmem>>, %arg7: memref<8x256xf32, #tpu.memory_space<vmem>>, %arg8: memref<8x256xf32, #tpu.memory_space<vmem>>, %arg9: memref<8x256xf32, #tpu.memory_space<vmem>>, %arg10: memref<8x256xf32, #tpu.memory_space<vmem>>) attributes {dimension_semantics = [#tpu.dimension_semantics<arbitrary>], iteration_bounds = array<i64: 1>, scalar_prefetch = 0 : i64, scratch_operands = 4 : i64, tpu.core_type = #tpu.core_type<tc>, window_params = [{transform_indices = @transform_0, window_bounds = array<i64: 8, 8, 1024>}, {transform_indices = @transform_1, window_bounds = array<i64: 8, 8, 1024>}, {pipeline_mode = #tpu.pipeline_mode<synchronous>, transform_indices = @transform_2, window_bounds = array<i64: 256, 1024>}, {pipeline_mode = #tpu.pipeline_mode<synchronous>, transform_indices = @transform_3, window_bounds = array<i64: 256, 1024>}, {transform_indices = @transform_4, window_bounds = array<i64: 8, 8, 256>}, {transform_indices = @transform_5, window_bounds = array<i64: 8, 8, 256>}]} {
    %c0_i32 = arith.constant 0 : i32
    %0 = arith.cmpi eq, %arg0, %c0_i32 : i32
    %1 = arith.extui %0 : i1 to i32
    %c0_i32_0 = arith.constant 0 : i32
    %2 = arith.cmpi ne, %1, %c0_i32_0 : i32
    scf.if %2 {
      %cst = arith.constant 0.000000e+00 : f32
      %4 = vector.broadcast %cst : f32 to vector<8x256xf32>
      %c0 = arith.constant 0 : index
      %c0_3 = arith.constant 0 : index
      %5 = vector.load %arg7[%c0, %c0_3] : memref<8x256xf32, #tpu.memory_space<vmem>>, vector<8x256xf32>
      tpu.vector_store %arg7[%c0, %c0_3], %4 {strides = array<i32>} : memref<8x256xf32, #tpu.memory_space<vmem>>, vector<8x256xf32>,
      %cst_4 = arith.constant 0.000000e+00 : f32
      %6 = vector.broadcast %cst_4 : f32 to vector<8x256xf32>
      %c0_5 = arith.constant 0 : index
      %c0_6 = arith.constant 0 : index
      %7 = vector.load %arg8[%c0_5, %c0_6] : memref<8x256xf32, #tpu.memory_space<vmem>>, vector<8x256xf32>
      tpu.vector_store %arg8[%c0_5, %c0_6], %6 {strides = array<i32>} : memref<8x256xf32, #tpu.memory_space<vmem>>, vector<8x256xf32>,
      %cst_7 = arith.constant 0.000000e+00 : f32
      %8 = vector.broadcast %cst_7 : f32 to vector<8x256xf32>
      %c0_8 = arith.constant 0 : index
      %c0_9 = arith.constant 0 : index
      %9 = vector.load %arg9[%c0_8, %c0_9] : memref<8x256xf32, #tpu.memory_space<vmem>>, vector<8x256xf32>
      tpu.vector_store %arg9[%c0_8, %c0_9], %8 {strides = array<i32>} : memref<8x256xf32, #tpu.memory_space<vmem>>, vector<8x256xf32>,
      %cst_10 = arith.constant 0.000000e+00 : f32
      %10 = vector.broadcast %cst_10 : f32 to vector<8x256xf32>
      %c0_11 = arith.constant 0 : index
      %c0_12 = arith.constant 0 : index
      %11 = vector.load %arg10[%c0_11, %c0_12] : memref<8x256xf32, #tpu.memory_space<vmem>>, vector<8x256xf32>
      tpu.vector_store %arg10[%c0_11, %c0_12], %10 {strides = array<i32>} : memref<8x256xf32, #tpu.memory_space<vmem>>, vector<8x256xf32>,
    } else {
    }
    %c0_i32_1 = arith.constant 0 : i32
    %c8_i32 = arith.constant 8 : i32
    %3 = arith.addi %c0_i32_1, %c8_i32 : i32
    %c1_i32 = arith.constant 1 : i32
    scf.for %arg11 = %c0_i32_1 to %3 step %c1_i32  : i32 {
      %4 = arith.index_cast %arg11 : i32 to index
      %c0 = arith.constant 0 : index
      %c0_3 = arith.constant 0 : index
      %5 = vector.load %arg1[%4, %c0, %c0_3] : memref<8x8x1024xf32, #tpu.memory_space<vmem>>, vector<1x8x1024xf32>
      %6 = vector.shape_cast %5 : vector<1x8x1024xf32> to vector<8x1024xf32>
      %c0_4 = arith.constant 0 : index
      %c0_5 = arith.constant 0 : index
      %7 = vector.load %arg7[%c0_4, %c0_5] : memref<8x256xf32, #tpu.memory_space<vmem>>, vector<8x256xf32>
      %c0_6 = arith.constant 0 : index
      %c0_7 = arith.constant 0 : index
      %8 = vector.load %arg8[%c0_6, %c0_7] : memref<8x256xf32, #tpu.memory_space<vmem>>, vector<8x256xf32>
      %9 = arith.truncf %7 : vector<8x256xf32> to vector<8x256xbf16>
      %c0_8 = arith.constant 0 : index
      %c0_9 = arith.constant 0 : index
      %10 = vector.load %arg3[%c0_8, %c0_9] : memref<256x1024xbf16, #tpu.memory_space<vmem>>, vector<256x1024xbf16>
      %cst = arith.constant dense<0.000000e+00> : vector<8x1024xf32>
      %11 = tpu.matmul %9, %10, %cst {dimension_numbers = #tpu.dot_dimension_numbers<[1], [0], [0], [1], [0, 0, 1, 1], [], []>} : vector<8x256xbf16>, vector<256x1024xbf16>, vector<8x1024xf32> -> vector<8x1024xf32>
      %12 = arith.addf %6, %11 : vector<8x1024xf32>
      %13 = vector.extract_strided_slice %12 {offsets = [0, 0], sizes = [8, 256], strides = [1, 1]} : vector<8x1024xf32> to vector<8x256xf32>
      %14 = arith.negf %13 : vector<8x256xf32>
      %15 = math.exp %14 : vector<8x256xf32>
      %cst_10 = arith.constant 1.000000e+00 : f32
      %16 = vector.broadcast %cst_10 : f32 to vector<8x256xf32>
      %17 = arith.addf %16, %15 : vector<8x256xf32>
      %18 = arith.divf %16, %17 : vector<8x256xf32>
      %19 = vector.extract_strided_slice %12 {offsets = [0, 256], sizes = [8, 256], strides = [1, 1]} : vector<8x1024xf32> to vector<8x256xf32>
      %20 = arith.negf %19 : vector<8x256xf32>
      %21 = math.exp %20 : vector<8x256xf32>
      %cst_11 = arith.constant 1.000000e+00 : f32
      %22 = vector.broadcast %cst_11 : f32 to vector<8x256xf32>
      %23 = arith.addf %22, %21 : vector<8x256xf32>
      %24 = arith.divf %22, %23 : vector<8x256xf32>
      %25 = vector.extract_strided_slice %12 {offsets = [0, 512], sizes = [8, 256], strides = [1, 1]} : vector<8x1024xf32> to vector<8x256xf32>
      %26 = math.tanh %25 : vector<8x256xf32>
      %27 = vector.extract_strided_slice %12 {offsets = [0, 768], sizes = [8, 256], strides = [1, 1]} : vector<8x1024xf32> to vector<8x256xf32>
      %28 = arith.negf %27 : vector<8x256xf32>
      %29 = math.exp %28 : vector<8x256xf32>
      %cst_12 = arith.constant 1.000000e+00 : f32
      %30 = vector.broadcast %cst_12 : f32 to vector<8x256xf32>
      %31 = arith.addf %30, %29 : vector<8x256xf32>
      %32 = arith.divf %30, %31 : vector<8x256xf32>
      %33 = arith.mulf %24, %8 : vector<8x256xf32>
      %34 = arith.mulf %18, %26 : vector<8x256xf32>
      %35 = arith.addf %33, %34 : vector<8x256xf32>
      %36 = math.tanh %35 : vector<8x256xf32>
      %37 = arith.mulf %32, %36 : vector<8x256xf32>
      %c0_13 = arith.constant 0 : index
      %c0_14 = arith.constant 0 : index
      %38 = vector.load %arg7[%c0_13, %c0_14] : memref<8x256xf32, #tpu.memory_space<vmem>>, vector<8x256xf32>
      tpu.vector_store %arg7[%c0_13, %c0_14], %37 {strides = array<i32>} : memref<8x256xf32, #tpu.memory_space<vmem>>, vector<8x256xf32>,
      %c0_15 = arith.constant 0 : index
      %c0_16 = arith.constant 0 : index
      %39 = vector.load %arg8[%c0_15, %c0_16] : memref<8x256xf32, #tpu.memory_space<vmem>>, vector<8x256xf32>
      tpu.vector_store %arg8[%c0_15, %c0_16], %35 {strides = array<i32>} : memref<8x256xf32, #tpu.memory_space<vmem>>, vector<8x256xf32>,
      %40 = arith.index_cast %arg11 : i32 to index
      %c0_17 = arith.constant 0 : index
      %c0_18 = arith.constant 0 : index
      %41 = vector.load %arg5[%40, %c0_17, %c0_18] : memref<8x8x256xf32, #tpu.memory_space<vmem>>, vector<1x8x256xf32>
      %42 = vector.shape_cast %41 : vector<1x8x256xf32> to vector<8x256xf32>
      %43 = vector.shape_cast %37 : vector<8x256xf32> to vector<1x8x256xf32>
      tpu.vector_store %arg5[%40, %c0_17, %c0_18], %43 {strides = array<i32>} : memref<8x8x256xf32, #tpu.memory_space<vmem>>, vector<1x8x256xf32>,
      %c7_i32 = arith.constant 7 : i32
      %44 = arith.subi %c7_i32, %arg11 : i32
      %45 = arith.index_cast %44 : i32 to index
      %c0_19 = arith.constant 0 : index
      %c0_20 = arith.constant 0 : index
      %46 = vector.load %arg2[%45, %c0_19, %c0_20] : memref<8x8x1024xf32, #tpu.memory_space<vmem>>, vector<1x8x1024xf32>
      %47 = vector.shape_cast %46 : vector<1x8x1024xf32> to vector<8x1024xf32>
      %c0_21 = arith.constant 0 : index
      %c0_22 = arith.constant 0 : index
      %48 = vector.load %arg9[%c0_21, %c0_22] : memref<8x256xf32, #tpu.memory_space<vmem>>, vector<8x256xf32>
      %c0_23 = arith.constant 0 : index
      %c0_24 = arith.constant 0 : index
      %49 = vector.load %arg10[%c0_23, %c0_24] : memref<8x256xf32, #tpu.memory_space<vmem>>, vector<8x256xf32>
      %50 = arith.truncf %48 : vector<8x256xf32> to vector<8x256xbf16>
      %c0_25 = arith.constant 0 : index
      %c0_26 = arith.constant 0 : index
      %51 = vector.load %arg4[%c0_25, %c0_26] : memref<256x1024xbf16, #tpu.memory_space<vmem>>, vector<256x1024xbf16>
      %cst_27 = arith.constant dense<0.000000e+00> : vector<8x1024xf32>
      %52 = tpu.matmul %50, %51, %cst_27 {dimension_numbers = #tpu.dot_dimension_numbers<[1], [0], [0], [1], [0, 0, 1, 1], [], []>} : vector<8x256xbf16>, vector<256x1024xbf16>, vector<8x1024xf32> -> vector<8x1024xf32>
      %53 = arith.addf %47, %52 : vector<8x1024xf32>
      %54 = vector.extract_strided_slice %53 {offsets = [0, 0], sizes = [8, 256], strides = [1, 1]} : vector<8x1024xf32> to vector<8x256xf32>
      %55 = arith.negf %54 : vector<8x256xf32>
      %56 = math.exp %55 : vector<8x256xf32>
      %cst_28 = arith.constant 1.000000e+00 : f32
      %57 = vector.broadcast %cst_28 : f32 to vector<8x256xf32>
      %58 = arith.addf %57, %56 : vector<8x256xf32>
      %59 = arith.divf %57, %58 : vector<8x256xf32>
      %60 = vector.extract_strided_slice %53 {offsets = [0, 256], sizes = [8, 256], strides = [1, 1]} : vector<8x1024xf32> to vector<8x256xf32>
      %61 = arith.negf %60 : vector<8x256xf32>
      %62 = math.exp %61 : vector<8x256xf32>
      %cst_29 = arith.constant 1.000000e+00 : f32
      %63 = vector.broadcast %cst_29 : f32 to vector<8x256xf32>
      %64 = arith.addf %63, %62 : vector<8x256xf32>
      %65 = arith.divf %63, %64 : vector<8x256xf32>
      %66 = vector.extract_strided_slice %53 {offsets = [0, 512], sizes = [8, 256], strides = [1, 1]} : vector<8x1024xf32> to vector<8x256xf32>
      %67 = math.tanh %66 : vector<8x256xf32>
      %68 = vector.extract_strided_slice %53 {offsets = [0, 768], sizes = [8, 256], strides = [1, 1]} : vector<8x1024xf32> to vector<8x256xf32>
      %69 = arith.negf %68 : vector<8x256xf32>
      %70 = math.exp %69 : vector<8x256xf32>
      %cst_30 = arith.constant 1.000000e+00 : f32
      %71 = vector.broadcast %cst_30 : f32 to vector<8x256xf32>
      %72 = arith.addf %71, %70 : vector<8x256xf32>
      %73 = arith.divf %71, %72 : vector<8x256xf32>
      %74 = arith.mulf %65, %49 : vector<8x256xf32>
      %75 = arith.mulf %59, %67 : vector<8x256xf32>
      %76 = arith.addf %74, %75 : vector<8x256xf32>
      %77 = math.tanh %76 : vector<8x256xf32>
      %78 = arith.mulf %73, %77 : vector<8x256xf32>
      %c0_31 = arith.constant 0 : index
      %c0_32 = arith.constant 0 : index
      %79 = vector.load %arg9[%c0_31, %c0_32] : memref<8x256xf32, #tpu.memory_space<vmem>>, vector<8x256xf32>
      tpu.vector_store %arg9[%c0_31, %c0_32], %78 {strides = array<i32>} : memref<8x256xf32, #tpu.memory_space<vmem>>, vector<8x256xf32>,
      %c0_33 = arith.constant 0 : index
      %c0_34 = arith.constant 0 : index
      %80 = vector.load %arg10[%c0_33, %c0_34] : memref<8x256xf32, #tpu.memory_space<vmem>>, vector<8x256xf32>
      tpu.vector_store %arg10[%c0_33, %c0_34], %76 {strides = array<i32>} : memref<8x256xf32, #tpu.memory_space<vmem>>, vector<8x256xf32>,
      %81 = arith.index_cast %44 : i32 to index
      %c0_35 = arith.constant 0 : index
      %c0_36 = arith.constant 0 : index
      %82 = vector.load %arg6[%81, %c0_35, %c0_36] : memref<8x8x256xf32, #tpu.memory_space<vmem>>, vector<1x8x256xf32>
      %83 = vector.shape_cast %82 : vector<1x8x256xf32> to vector<8x256xf32>
      %84 = vector.shape_cast %78 : vector<8x256xf32> to vector<1x8x256xf32>
      tpu.vector_store %arg6[%81, %c0_35, %c0_36], %84 {strides = array<i32>} : memref<8x8x256xf32, #tpu.memory_space<vmem>>, vector<1x8x256xf32>,
    }
    %c8_i32_2 = arith.constant 8 : i32
    return
  }
  func.func @transform_0(%arg0: i32) -> (i32, i32, i32) {
    %c0_i32 = arith.constant 0 : i32
    %c0_i32_0 = arith.constant 0 : i32
    %c0_i32_1 = arith.constant 0 : i32
    return %arg0, %c0_i32, %c0_i32_0 : i32, i32, i32
  }
  func.func @transform_1(%arg0: i32) -> (i32, i32, i32) {
    %c0_i32 = arith.constant 0 : i32
    %0 = arith.subi %c0_i32, %arg0 : i32
    %c0_i32_0 = arith.constant 0 : i32
    %c0_i32_1 = arith.constant 0 : i32
    %c0_i32_2 = arith.constant 0 : i32
    return %0, %c0_i32_0, %c0_i32_1 : i32, i32, i32
  }
  func.func @transform_2(%arg0: i32) -> (i32, i32) {
    %c0_i32 = arith.constant 0 : i32
    %c0_i32_0 = arith.constant 0 : i32
    %c0_i32_1 = arith.constant 0 : i32
    return %c0_i32, %c0_i32_0 : i32, i32
  }
  func.func @transform_3(%arg0: i32) -> (i32, i32) {
    %c0_i32 = arith.constant 0 : i32
    %c0_i32_0 = arith.constant 0 : i32
    %c0_i32_1 = arith.constant 0 : i32
    return %c0_i32, %c0_i32_0 : i32, i32
  }
  func.func @transform_4(%arg0: i32) -> (i32, i32, i32) {
    %c0_i32 = arith.constant 0 : i32
    %c0_i32_0 = arith.constant 0 : i32
    %c0_i32_1 = arith.constant 0 : i32
    return %arg0, %c0_i32, %c0_i32_0 : i32, i32, i32
  }
  func.func @transform_5(%arg0: i32) -> (i32, i32, i32) {
    %c0_i32 = arith.constant 0 : i32
    %0 = arith.subi %c0_i32, %arg0 : i32
    %c0_i32_0 = arith.constant 0 : i32
    %c0_i32_1 = arith.constant 0 : i32
    %c0_i32_2 = arith.constant 0 : i32
    return %0, %c0_i32_0, %c0_i32_1 : i32, i32, i32
  }
}

module attributes {stable_mosaic.version = 11 : i64} {
  func.func @_fc_logsoftmax_kernel(%arg0: i32, %arg1: memref<64x256xbf16, #tpu.memory_space<vmem>>, %arg2: memref<64x256xbf16, #tpu.memory_space<vmem>>, %arg3: memref<256x128xbf16, #tpu.memory_space<vmem>>, %arg4: memref<256x128xbf16, #tpu.memory_space<vmem>>, %arg5: memref<1x128xf32, #tpu.memory_space<vmem>>, %arg6: memref<64x128xf32, #tpu.memory_space<vmem>>) attributes {dimension_semantics = [#tpu.dimension_semantics<parallel>], iteration_bounds = array<i64: 1>, scalar_prefetch = 0 : i64, scratch_operands = 0 : i64, tpu.core_type = #tpu.core_type<tc>, window_params = [{transform_indices = @transform_0, window_bounds = array<i64: 64, 256>}, {transform_indices = @transform_1, window_bounds = array<i64: 64, 256>}, {pipeline_mode = #tpu.pipeline_mode<synchronous>, transform_indices = @transform_2, window_bounds = array<i64: 256, 128>}, {pipeline_mode = #tpu.pipeline_mode<synchronous>, transform_indices = @transform_3, window_bounds = array<i64: 256, 128>}, {pipeline_mode = #tpu.pipeline_mode<synchronous>, transform_indices = @transform_4, window_bounds = array<i64: 1, 128>}, {transform_indices = @transform_5, window_bounds = array<i64: 64, 128>}]} {
    %c0 = arith.constant 0 : index
    %c0_0 = arith.constant 0 : index
    %0 = vector.load %arg1[%c0, %c0_0] : memref<64x256xbf16, #tpu.memory_space<vmem>>, vector<64x256xbf16>
    %c0_1 = arith.constant 0 : index
    %c0_2 = arith.constant 0 : index
    %1 = vector.load %arg3[%c0_1, %c0_2] : memref<256x128xbf16, #tpu.memory_space<vmem>>, vector<256x128xbf16>
    %cst = arith.constant dense<0.000000e+00> : vector<64x128xf32>
    %2 = tpu.matmul %0, %1, %cst {dimension_numbers = #tpu.dot_dimension_numbers<[1], [0], [0], [1], [0, 0, 1, 1], [], []>} : vector<64x256xbf16>, vector<256x128xbf16>, vector<64x128xf32> -> vector<64x128xf32>
    %c0_3 = arith.constant 0 : index
    %c0_4 = arith.constant 0 : index
    %3 = vector.load %arg2[%c0_3, %c0_4] : memref<64x256xbf16, #tpu.memory_space<vmem>>, vector<64x256xbf16>
    %c0_5 = arith.constant 0 : index
    %c0_6 = arith.constant 0 : index
    %4 = vector.load %arg4[%c0_5, %c0_6] : memref<256x128xbf16, #tpu.memory_space<vmem>>, vector<256x128xbf16>
    %cst_7 = arith.constant dense<0.000000e+00> : vector<64x128xf32>
    %5 = tpu.matmul %3, %4, %cst_7 {dimension_numbers = #tpu.dot_dimension_numbers<[1], [0], [0], [1], [0, 0, 1, 1], [], []>} : vector<64x256xbf16>, vector<256x128xbf16>, vector<64x128xf32> -> vector<64x128xf32>
    %6 = arith.addf %2, %5 : vector<64x128xf32>
    %c0_8 = arith.constant 0 : index
    %c0_9 = arith.constant 0 : index
    %7 = vector.load %arg5[%c0_8, %c0_9] : memref<1x128xf32, #tpu.memory_space<vmem>>, vector<1x128xf32>
    %8 = vector.broadcast %7 : vector<1x128xf32> to vector<64x128xf32>
    %9 = arith.addf %6, %8 : vector<64x128xf32>
    %cst_10 = arith.constant dense<0xFF800000> : vector<64xf32>
    %10 = vector.multi_reduction <maximumf>, %9, %cst_10 [1] : vector<64x128xf32> to vector<64xf32>
    %11 = vector.shape_cast %10 : vector<64xf32> to vector<64x1xf32>
    %12 = vector.broadcast %11 : vector<64x1xf32> to vector<64x128xf32>
    %13 = arith.subf %9, %12 : vector<64x128xf32>
    %14 = math.exp %13 : vector<64x128xf32>
    %cst_11 = arith.constant dense<0.000000e+00> : vector<64xf32>
    %15 = vector.multi_reduction <add>, %14, %cst_11 [1] : vector<64x128xf32> to vector<64xf32>
    %16 = vector.shape_cast %15 : vector<64xf32> to vector<64x1xf32>
    %17 = math.log %16 : vector<64x1xf32>
    %18 = vector.broadcast %17 : vector<64x1xf32> to vector<64x128xf32>
    %19 = arith.subf %13, %18 : vector<64x128xf32>
    %c0_12 = arith.constant 0 : index
    %c0_13 = arith.constant 0 : index
    %20 = vector.load %arg6[%c0_12, %c0_13] : memref<64x128xf32, #tpu.memory_space<vmem>>, vector<64x128xf32>
    tpu.vector_store %arg6[%c0_12, %c0_13], %19 {strides = array<i32>} : memref<64x128xf32, #tpu.memory_space<vmem>>, vector<64x128xf32>,
    return
  }
  func.func @transform_0(%arg0: i32) -> (i32, i32) {
    %c0_i32 = arith.constant 0 : i32
    %c0_i32_0 = arith.constant 0 : i32
    return %arg0, %c0_i32 : i32, i32
  }
  func.func @transform_1(%arg0: i32) -> (i32, i32) {
    %c0_i32 = arith.constant 0 : i32
    %c0_i32_0 = arith.constant 0 : i32
    return %arg0, %c0_i32 : i32, i32
  }
  func.func @transform_2(%arg0: i32) -> (i32, i32) {
    %c0_i32 = arith.constant 0 : i32
    %c0_i32_0 = arith.constant 0 : i32
    %c0_i32_1 = arith.constant 0 : i32
    return %c0_i32, %c0_i32_0 : i32, i32
  }
  func.func @transform_3(%arg0: i32) -> (i32, i32) {
    %c0_i32 = arith.constant 0 : i32
    %c0_i32_0 = arith.constant 0 : i32
    %c0_i32_1 = arith.constant 0 : i32
    return %c0_i32, %c0_i32_0 : i32, i32
  }
  func.func @transform_4(%arg0: i32) -> (i32, i32) {
    %c0_i32 = arith.constant 0 : i32
    %c0_i32_0 = arith.constant 0 : i32
    %c0_i32_1 = arith.constant 0 : i32
    return %c0_i32, %c0_i32_0 : i32, i32
  }
  func.func @transform_5(%arg0: i32) -> (i32, i32) {
    %c0_i32 = arith.constant 0 : i32
    %c0_i32_0 = arith.constant 0 : i32
    return %arg0, %c0_i32 : i32, i32
  }
}

</mosaic_0001>

<llo_original>
// kernel: brnn_forward.5
$region0: #{brnn_forward.5}
  #allocation0 [shape = 'u32[]', space=smem, size = 0x4, offset = 0x4, fixed_abs, tag = 'smem constant byte address 0x4 - core index']
  #allocation1 [shape = 'u32[144,128]{1,0:T(1,128)}', space=vmem, size = 0x12000, scoped, tag = 'internal scratch']
  %s0 = inlined_call_operand.vmem [shape: bf16[64,256], index: 0, kind: input, shape index: {}]
  %s1 = inlined_call_operand.vmem [shape: bf16[64,256], index: 1, kind: input, shape index: {}]
  %s2 = inlined_call_operand.vmem [shape: bf16[256,128], index: 2, kind: input, shape index: {}]
  %s3 = inlined_call_operand.vmem [shape: bf16[256,128], index: 3, kind: input, shape index: {}]
  %s4 = inlined_call_operand.vmem [shape: f32[1,128], index: 4, kind: input, shape index: {}]
  %s5 = inlined_call_operand.vmem [shape: f32[64,128], index: 5, kind: output, shape index: {}]
  %s6 = sld [smem:[#allocation0]]
  $region30: #{brnn_forward.5} parent=0
    _
  %s8 = ssub.s32 1, %s6
  %s9 = scalar_select 0, %s8, %s6
  // Predicated region
  $region2: #{brnn_forward.5} parent=0 // pred_check
    _
  $region3: #{brnn_forward.5} parent=0 // pred_check_branch
    %11 = sbr.rel (0) target = $region5
  $region4: #{brnn_forward.5} parent=0 // pred_region
    _
  $region5: #{brnn_forward.5} parent=0 // pred_fallthru
    _
  // Predicated region
  $region6: #{brnn_forward.5} parent=0 // pred_check
    _
  $region7: #{brnn_forward.5} parent=0 // pred_check_branch
    %13 = sbr.rel (0) target = $region9
  $region8: #{brnn_forward.5} parent=0 // pred_region
    _
  $region9: #{brnn_forward.5} parent=0 // pred_fallthru
    _
  // Predicated region
  $region10: #{brnn_forward.5} parent=0 // pred_check
    _
  $region11: #{brnn_forward.5} parent=0 // pred_check_branch
    %15 = sbr.rel (0) target = $region13
  $region12: #{brnn_forward.5} parent=0 // pred_region
    _
  $region13: #{brnn_forward.5} parent=0 // pred_fallthru
    _
  // Predicated region
  $region14: #{brnn_forward.5} parent=0 // pred_check
    _
  $region15: #{brnn_forward.5} parent=0 // pred_check_branch
    %17 = sbr.rel (0) target = $region17
  $region16: #{brnn_forward.5} parent=0 // pred_region
    _
  $region17: #{brnn_forward.5} parent=0 // pred_fallthru
    _
  // Predicated region
  $region18: #{brnn_forward.5} parent=0 // pred_check
    _
  $region19: #{brnn_forward.5} parent=0 // pred_check_branch
    %19 = sbr.rel (0) target = $region21
  $region20: #{brnn_forward.5} parent=0 // pred_region
    _
  $region21: #{brnn_forward.5} parent=0 // pred_fallthru
    _
  %v21 = vld [vmem:[%s0] sm:$0xff]
  %v22 = vld [vmem:[%s0 + $0x8] sm:$0xff]
  %v23 = vld [vmem:[%s0 + $0x10] sm:$0xff]
  %v24 = vld [vmem:[%s0 + $0x18] sm:$0xff]
  %v25 = vld [vmem:[%s0 + $0x20] sm:$0xff]
  %v26 = vld [vmem:[%s0 + $0x28] sm:$0xff]
  %v27 = vld [vmem:[%s0 + $0x30] sm:$0xff]
  %v28 = vld [vmem:[%s0 + $0x38] sm:$0xff]
  %v29 = vld [vmem:[%s2] sm:$0xf]
  %v30 = vld [vmem:[%s2 + $0x4] sm:$0xf]
  %v31 = vld [vmem:[%s2 + $0x8] sm:$0xf]
  %v32 = vld [vmem:[%s2 + $0xc] sm:$0xf]
  %v33 = vld [vmem:[%s2 + $0x10] sm:$0xf]
  %v34 = vld [vmem:[%s2 + $0x14] sm:$0xf]
  %v35 = vld [vmem:[%s2 + $0x18] sm:$0xf]
  %v36 = vld [vmem:[%s2 + $0x1c] sm:$0xf]
  %v37 = vld [vmem:[%s2 + $0x20] sm:$0xf]
  %v38 = vld [vmem:[%s2 + $0x24] sm:$0xf]
  %v39 = vld [vmem:[%s2 + $0x28] sm:$0xf]
  %v40 = vld [vmem:[%s2 + $0x2c] sm:$0xf]
  %v41 = vld [vmem:[%s2 + $0x30] sm:$0xf]
  %v42 = vld [vmem:[%s2 + $0x34] sm:$0xf]
  %v43 = vld [vmem:[%s2 + $0x38] sm:$0xf]
  %v44 = vld [vmem:[%s2 + $0x3c] sm:$0xf]
  %v45 = vld [vmem:[%s2 + $0x40] sm:$0xf]
  %v46 = vld [vmem:[%s2 + $0x44] sm:$0xf]
  %v47 = vld [vmem:[%s2 + $0x48] sm:$0xf]
  %v48 = vld [vmem:[%s2 + $0x4c] sm:$0xf]
  %v49 = vld [vmem:[%s2 + $0x50] sm:$0xf]
  %v50 = vld [vmem:[%s2 + $0x54] sm:$0xf]
  %v51 = vld [vmem:[%s2 + $0x58] sm:$0xf]
  %v52 = vld [vmem:[%s2 + $0x5c] sm:$0xf]
  %v53 = vld [vmem:[%s2 + $0x60] sm:$0xf]
  %v54 = vld [vmem:[%s2 + $0x64] sm:$0xf]
  %v55 = vld [vmem:[%s2 + $0x68] sm:$0xf]
  %v56 = vld [vmem:[%s2 + $0x6c] sm:$0xf]
  %v57 = vld [vmem:[%s2 + $0x70] sm:$0xf]
  %v58 = vld [vmem:[%s2 + $0x74] sm:$0xf]
  %v59 = vld [vmem:[%s2 + $0x78] sm:$0xf]
  %v60 = vld [vmem:[%s2 + $0x7c] sm:$0xf]
  %v61 = vld [vmem:[%s1] sm:$0xff]
  %v62 = vld [vmem:[%s1 + $0x8] sm:$0xff]
  %v63 = vld [vmem:[%s1 + $0x10] sm:$0xff]
  %v64 = vld [vmem:[%s1 + $0x18] sm:$0xff]
  %v65 = vld [vmem:[%s1 + $0x20] sm:$0xff]
  %v66 = vld [vmem:[%s1 + $0x28] sm:$0xff]
  %v67 = vld [vmem:[%s1 + $0x30] sm:$0xff]
  %v68 = vld [vmem:[%s1 + $0x38] sm:$0xff]
  %v69 = vld [vmem:[%s3] sm:$0xf]
  %v70 = vld [vmem:[%s3 + $0x4] sm:$0xf]
  %v71 = vld [vmem:[%s3 + $0x8] sm:$0xf]
  %v72 = vld [vmem:[%s3 + $0xc] sm:$0xf]
  %v73 = vld [vmem:[%s3 + $0x10] sm:$0xf]
  %v74 = vld [vmem:[%s3 + $0x14] sm:$0xf]
  %v75 = vld [vmem:[%s3 + $0x18] sm:$0xf]
  %v76 = vld [vmem:[%s3 + $0x1c] sm:$0xf]
  %v77 = vld [vmem:[%s3 + $0x20] sm:$0xf]
  %v78 = vld [vmem:[%s3 + $0x24] sm:$0xf]
  %v79 = vld [vmem:[%s3 + $0x28] sm:$0xf]
  %v80 = vld [vmem:[%s3 + $0x2c] sm:$0xf]
  %v81 = vld [vmem:[%s3 + $0x30] sm:$0xf]
  %v82 = vld [vmem:[%s3 + $0x34] sm:$0xf]
  %v83 = vld [vmem:[%s3 + $0x38] sm:$0xf]
  %v84 = vld [vmem:[%s3 + $0x3c] sm:$0xf]
  %v85 = vld [vmem:[%s3 + $0x40] sm:$0xf]
  %v86 = vld [vmem:[%s3 + $0x44] sm:$0xf]
  %v87 = vld [vmem:[%s3 + $0x48] sm:$0xf]
  %v88 = vld [vmem:[%s3 + $0x4c] sm:$0xf]
  %v89 = vld [vmem:[%s3 + $0x50] sm:$0xf]
  %v90 = vld [vmem:[%s3 + $0x54] sm:$0xf]
  %v91 = vld [vmem:[%s3 + $0x58] sm:$0xf]
  %v92 = vld [vmem:[%s3 + $0x5c] sm:$0xf]
  %v93 = vld [vmem:[%s3 + $0x60] sm:$0xf]
  %v94 = vld [vmem:[%s3 + $0x64] sm:$0xf]
  %v95 = vld [vmem:[%s3 + $0x68] sm:$0xf]
  %v96 = vld [vmem:[%s3 + $0x6c] sm:$0xf]
  %v97 = vld [vmem:[%s3 + $0x70] sm:$0xf]
  %v98 = vld [vmem:[%s3 + $0x74] sm:$0xf]
  %v99 = vld [vmem:[%s3 + $0x78] sm:$0xf]
  %v100 = vld [vmem:[%s3 + $0x7c] sm:$0xf]
  %v109 = vunpack.c.l.b16 %v61
  %v110 = vunpack.c.h.b16 %v61
  %v111 = vunpack.c.l.b16 %v62
  %v112 = vunpack.c.h.b16 %v62
  %v113 = vunpack.c.l.b16 %v63
  %v114 = vunpack.c.h.b16 %v63
  %v115 = vunpack.c.l.b16 %v64
  %v116 = vunpack.c.h.b16 %v64
  %v117 = vunpack.c.l.b16 %v65
  %v118 = vunpack.c.h.b16 %v65
  %v119 = vunpack.c.l.b16 %v66
  %v120 = vunpack.c.h.b16 %v66
  %v121 = vunpack.c.l.b16 %v67
  %v122 = vunpack.c.h.b16 %v67
  %v123 = vunpack.c.l.b16 %v68
  %v124 = vunpack.c.h.b16 %v68
  %v125 = vpack.c.b16 %v111, %v109
  %v126 = vpack.c.b16 %v112, %v110
  %v127 = vpack.c.b16 %v115, %v113
  %v128 = vpack.c.b16 %v116, %v114
  %v129 = vpack.c.b16 %v119, %v117
  %v130 = vpack.c.b16 %v120, %v118
  %v131 = vpack.c.b16 %v123, %v121
  %v132 = vpack.c.b16 %v124, %v122
  %v173 = vunpack.c.l.b16 %v69
  %v174 = vunpack.c.l.b16 %v70
  %v175 = vunpack.c.l.b16 %v71
  %v176 = vunpack.c.l.b16 %v72
  %v177 = vunpack.c.l.b16 %v73
  %v178 = vunpack.c.l.b16 %v74
  %v179 = vunpack.c.l.b16 %v75
  %v180 = vunpack.c.l.b16 %v76
  %v181 = vunpack.c.l.b16 %v77
  %v182 = vunpack.c.l.b16 %v78
  %v183 = vunpack.c.l.b16 %v79
  %v184 = vunpack.c.l.b16 %v80
  %v185 = vunpack.c.l.b16 %v81
  %v186 = vunpack.c.l.b16 %v82
  %v187 = vunpack.c.l.b16 %v83
  %v188 = vunpack.c.l.b16 %v84
  %v189 = vunpack.c.l.b16 %v85
  %v190 = vunpack.c.l.b16 %v86
  %v191 = vunpack.c.l.b16 %v87
  %v192 = vunpack.c.l.b16 %v88
  %v193 = vunpack.c.l.b16 %v89
  %v194 = vunpack.c.l.b16 %v90
  %v195 = vunpack.c.l.b16 %v91
  %v196 = vunpack.c.l.b16 %v92
  %v197 = vunpack.c.l.b16 %v93
  %v198 = vunpack.c.l.b16 %v94
  %v199 = vunpack.c.l.b16 %v95
  %v200 = vunpack.c.l.b16 %v96
  %v201 = vunpack.c.l.b16 %v97
  %v202 = vunpack.c.l.b16 %v98
  %v203 = vunpack.c.l.b16 %v99
  %v204 = vunpack.c.l.b16 %v100
  %v205 = vpack.c.b16 %v174, %v173
  %v206 = vpack.c.b16 %v176, %v175
  %v207 = vpack.c.b16 %v178, %v177
  %v208 = vpack.c.b16 %v180, %v179
  %v209 = vpack.c.b16 %v182, %v181
  %v210 = vpack.c.b16 %v184, %v183
  %v211 = vpack.c.b16 %v186, %v185
  %v212 = vpack.c.b16 %v188, %v187
  %v213 = vpack.c.b16 %v190, %v189
  %v214 = vpack.c.b16 %v192, %v191
  %v215 = vpack.c.b16 %v194, %v193
  %v216 = vpack.c.b16 %v196, %v195
  %v217 = vpack.c.b16 %v198, %v197
  %v218 = vpack.c.b16 %v200, %v199
  %v219 = vpack.c.b16 %v202, %v201
  %v220 = vpack.c.b16 %v204, %v203
  %237 = vmatprep.subr.bf16.mxu0 0
  %238 = vmatpush1.bf16.msra.mxu0 %v205
  %239 = vmatprep.subr.bf16.mxu0 0
  %240 = vmatpush1.bf16.msra.mxu0 %v206
  %241 = vmatprep.subr.bf16.mxu0 0
  %242 = vmatpush1.bf16.msra.mxu0 %v207
  %243 = vmatprep.subr.bf16.mxu0 0
  %244 = vmatpush1.bf16.msra.mxu0 %v208
  %245 = vmatprep.subr.bf16.mxu0 0
  %246 = vmatpush1.bf16.msra.mxu0 %v209
  %247 = vmatprep.subr.bf16.mxu0 0
  %248 = vmatpush1.bf16.msra.mxu0 %v210
  %249 = vmatprep.subr.bf16.mxu0 0
  %250 = vmatpush1.bf16.msra.mxu0 %v211
  %251 = vmatprep.subr.bf16.mxu0 0
  %252 = vmatpush1.bf16.msra.mxu0 %v212
  %253 = vmatprep.subr.bf16.mxu0 0
  %254 = vmatpush1.bf16.msra.mxu0 %v213
  %255 = vmatprep.subr.bf16.mxu0 0
  %256 = vmatpush1.bf16.msra.mxu0 %v214
  %257 = vmatprep.subr.bf16.mxu0 0
  %258 = vmatpush1.bf16.msra.mxu0 %v215
  %259 = vmatprep.subr.bf16.mxu0 0
  %260 = vmatpush1.bf16.msra.mxu0 %v216
  %261 = vmatprep.subr.bf16.mxu0 0
  %262 = vmatpush1.bf16.msra.mxu0 %v217
  %263 = vmatprep.subr.bf16.mxu0 0
  %264 = vmatpush1.bf16.msra.mxu0 %v218
  %265 = vmatprep.subr.bf16.mxu0 0
  %266 = vmatpush1.bf16.msra.mxu0 %v219
  %267 = vmatprep.subr.bf16.mxu0 0
  %268 = vmatpush1.bf16.msra.mxu0 %v220
  %269 = vmatprep.mubr.bf16.mxu0 %v126
  %270 = vmatmul.mubr.bf16.gmra.mrb[0].mxu0 %v125
  %v271 = vpop.f32.mrb[0].mxu0
  %v272 = vadd.f32 0.0, %v271
  %v273 = vpop.f32.mrb[0].mxu0
  %v274 = vpop.f32.mrb[0].mxu0
  %v275 = vadd.f32 0.0, %v274
  %v276 = vpop.f32.mrb[0].mxu0
  %277 = vmatprep.mubr.bf16.mxu0 %v128
  %278 = vmatmul.mubr.bf16.gmra.mrb[0].mxu0 %v127
  %v279 = vpop.f32.mrb[0].mxu0
  %v280 = vadd.f32 0.0, %v279
  %v281 = vpop.f32.mrb[0].mxu0
  %v282 = vpop.f32.mrb[0].mxu0
  %v283 = vadd.f32 0.0, %v282
  %v284 = vpop.f32.mrb[0].mxu0
  %285 = vmatprep.mubr.bf16.mxu0 %v130
  %286 = vmatmul.mubr.bf16.gmra.mrb[0].mxu0 %v129
  %v287 = vpop.f32.mrb[0].mxu0
  %v288 = vadd.f32 0.0, %v287
  %v289 = vpop.f32.mrb[0].mxu0
  %v290 = vpop.f32.mrb[0].mxu0
  %v291 = vadd.f32 0.0, %v290
  %v292 = vpop.f32.mrb[0].mxu0
  %293 = vmatprep.mubr.bf16.mxu0 %v132
  %294 = vmatmul.mubr.bf16.gmra.mrb[0].mxu0 %v131
  %v295 = vpop.f32.mrb[0].mxu0
  %v296 = vadd.f32 0.0, %v295
  %v297 = vpop.f32.mrb[0].mxu0
  %v298 = vpop.f32.mrb[0].mxu0
  %v299 = vadd.f32 0.0, %v298
  %v300 = vpop.f32.mrb[0].mxu0
  %301 = vdwg.mxu0
  %v310 = vunpack.c.l.b16 %v21
  %v311 = vunpack.c.h.b16 %v21
  %v312 = vunpack.c.l.b16 %v22
  %v313 = vunpack.c.h.b16 %v22
  %v314 = vunpack.c.l.b16 %v23
  %v315 = vunpack.c.h.b16 %v23
  %v316 = vunpack.c.l.b16 %v24
  %v317 = vunpack.c.h.b16 %v24
  %v318 = vunpack.c.l.b16 %v25
  %v319 = vunpack.c.h.b16 %v25
  %v320 = vunpack.c.l.b16 %v26
  %v321 = vunpack.c.h.b16 %v26
  %v322 = vunpack.c.l.b16 %v27
  %v323 = vunpack.c.h.b16 %v27
  %v324 = vunpack.c.l.b16 %v28
  %v325 = vunpack.c.h.b16 %v28
  %v326 = vpack.c.b16 %v312, %v310
  %v327 = vpack.c.b16 %v313, %v311
  %v328 = vpack.c.b16 %v316, %v314
  %v329 = vpack.c.b16 %v317, %v315
  %v330 = vpack.c.b16 %v320, %v318
  %v331 = vpack.c.b16 %v321, %v319
  %v332 = vpack.c.b16 %v324, %v322
  %v333 = vpack.c.b16 %v325, %v323
  %v374 = vunpack.c.l.b16 %v29
  %v375 = vunpack.c.l.b16 %v30
  %v376 = vunpack.c.l.b16 %v31
  %v377 = vunpack.c.l.b16 %v32
  %v378 = vunpack.c.l.b16 %v33
  %v379 = vunpack.c.l.b16 %v34
  %v380 = vunpack.c.l.b16 %v35
  %v381 = vunpack.c.l.b16 %v36
  %v382 = vunpack.c.l.b16 %v37
  %v383 = vunpack.c.l.b16 %v38
  %v384 = vunpack.c.l.b16 %v39
  %v385 = vunpack.c.l.b16 %v40
  %v386 = vunpack.c.l.b16 %v41
  %v387 = vunpack.c.l.b16 %v42
  %v388 = vunpack.c.l.b16 %v43
  %v389 = vunpack.c.l.b16 %v44
  %v390 = vunpack.c.l.b16 %v45
  %v391 = vunpack.c.l.b16 %v46
  %v392 = vunpack.c.l.b16 %v47
  %v393 = vunpack.c.l.b16 %v48
  %v394 = vunpack.c.l.b16 %v49
  %v395 = vunpack.c.l.b16 %v50
  %v396 = vunpack.c.l.b16 %v51
  %v397 = vunpack.c.l.b16 %v52
  %v398 = vunpack.c.l.b16 %v53
  %v399 = vunpack.c.l.b16 %v54
  %v400 = vunpack.c.l.b16 %v55
  %v401 = vunpack.c.l.b16 %v56
  %v402 = vunpack.c.l.b16 %v57
  %v403 = vunpack.c.l.b16 %v58
  %v404 = vunpack.c.l.b16 %v59
  %v405 = vunpack.c.l.b16 %v60
  %v406 = vpack.c.b16 %v375, %v374
  %v407 = vpack.c.b16 %v377, %v376
  %v408 = vpack.c.b16 %v379, %v378
  %v409 = vpack.c.b16 %v381, %v380
  %v410 = vpack.c.b16 %v383, %v382
  %v411 = vpack.c.b16 %v385, %v384
  %v412 = vpack.c.b16 %v387, %v386
  %v413 = vpack.c.b16 %v389, %v388
  %v414 = vpack.c.b16 %v391, %v390
  %v415 = vpack.c.b16 %v393, %v392
  %v416 = vpack.c.b16 %v395, %v394
  %v417 = vpack.c.b16 %v397, %v396
  %v418 = vpack.c.b16 %v399, %v398
  %v419 = vpack.c.b16 %v401, %v400
  %v420 = vpack.c.b16 %v403, %v402
  %v421 = vpack.c.b16 %v405, %v404
  %438 = vmatprep.subr.bf16.mxu0 0
  %439 = vmatpush1.bf16.msra.mxu0 %v406
  %440 = vmatprep.subr.bf16.mxu0 0
  %441 = vmatpush1.bf16.msra.mxu0 %v407
  %442 = vmatprep.subr.bf16.mxu0 0
  %443 = vmatpush1.bf16.msra.mxu0 %v408
  %444 = vmatprep.subr.bf16.mxu0 0
  %445 = vmatpush1.bf16.msra.mxu0 %v409
  %446 = vmatprep.subr.bf16.mxu0 0
  %447 = vmatpush1.bf16.msra.mxu0 %v410
  %448 = vmatprep.subr.bf16.mxu0 0
  %449 = vmatpush1.bf16.msra.mxu0 %v411
  %450 = vmatprep.subr.bf16.mxu0 0
  %451 = vmatpush1.bf16.msra.mxu0 %v412
  %452 = vmatprep.subr.bf16.mxu0 0
  %453 = vmatpush1.bf16.msra.mxu0 %v413
  %454 = vmatprep.subr.bf16.mxu0 0
  %455 = vmatpush1.bf16.msra.mxu0 %v414
  %456 = vmatprep.subr.bf16.mxu0 0
  %457 = vmatpush1.bf16.msra.mxu0 %v415
  %458 = vmatprep.subr.bf16.mxu0 0
  %459 = vmatpush1.bf16.msra.mxu0 %v416
  %460 = vmatprep.subr.bf16.mxu0 0
  %461 = vmatpush1.bf16.msra.mxu0 %v417
  %462 = vmatprep.subr.bf16.mxu0 0
  %463 = vmatpush1.bf16.msra.mxu0 %v418
  %464 = vmatprep.subr.bf16.mxu0 0
  %465 = vmatpush1.bf16.msra.mxu0 %v419
  %466 = vmatprep.subr.bf16.mxu0 0
  %467 = vmatpush1.bf16.msra.mxu0 %v420
  %468 = vmatprep.subr.bf16.mxu0 0
  %469 = vmatpush1.bf16.msra.mxu0 %v421
  %470 = vmatprep.mubr.bf16.mxu0 %v327
  %471 = vmatmul.mubr.bf16.gmra.mrb[0].mxu0 %v326
  %v472 = vpop.f32.mrb[0].mxu0
  %v473 = vadd.f32 %v272, %v472
  %v474 = vpop.f32.mrb[0].mxu0
  %v475 = vpop.f32.mrb[0].mxu0
  %v476 = vadd.f32 %v275, %v475
  %v477 = vpop.f32.mrb[0].mxu0
  %478 = vmatprep.mubr.bf16.mxu0 %v329
  %479 = vmatmul.mubr.bf16.gmra.mrb[0].mxu0 %v328
  %v480 = vpop.f32.mrb[0].mxu0
  %v481 = vadd.f32 %v280, %v480
  %v482 = vpop.f32.mrb[0].mxu0
  %v483 = vpop.f32.mrb[0].mxu0
  %v484 = vadd.f32 %v283, %v483
  %v485 = vpop.f32.mrb[0].mxu0
  %486 = vmatprep.mubr.bf16.mxu0 %v331
  %487 = vmatmul.mubr.bf16.gmra.mrb[0].mxu0 %v330
  %v488 = vpop.f32.mrb[0].mxu0
  %v489 = vadd.f32 %v288, %v488
  %v490 = vpop.f32.mrb[0].mxu0
  %v491 = vpop.f32.mrb[0].mxu0
  %v492 = vadd.f32 %v291, %v491
  %v493 = vpop.f32.mrb[0].mxu0
  %494 = vmatprep.mubr.bf16.mxu0 %v333
  %495 = vmatmul.mubr.bf16.gmra.mrb[0].mxu0 %v332
  %v496 = vpop.f32.mrb[0].mxu0
  %v497 = vadd.f32 %v296, %v496
  %v498 = vpop.f32.mrb[0].mxu0
  %v499 = vpop.f32.mrb[0].mxu0
  %v500 = vadd.f32 %v299, %v499
  %v501 = vpop.f32.mrb[0].mxu0
  %502 = vdwg.mxu0
  %v503 = vld [vmem:[%s4] sm:$0x1]
  %v505 = vlaneseq
  %v506 = vshrl.u32 %v505, 7
  %v507 = vsub.s32 0, %v506
  %v508 = vrot.slane %v503, %v507
  %v510 = vadd.f32 %v473, %v508
  %v511 = vadd.f32 %v476, %v508
  %v512 = vadd.f32 %v481, %v508
  %v513 = vadd.f32 %v484, %v508
  %v514 = vadd.f32 %v489, %v508
  %v515 = vadd.f32 %v492, %v508
  %v516 = vadd.f32 %v497, %v508
  %v517 = vadd.f32 %v500, %v508
  %518 = vmax.xlane.f32.xlu0 %v510
  %v519 = vpop.xlane.xlu0 %518
  %520 = vmax.xlane.f32.xlu0 %v511
  %v521 = vpop.xlane.xlu0 %520
  %522 = vmax.xlane.f32.xlu0 %v512
  %v523 = vpop.xlane.xlu0 %522
  %524 = vmax.xlane.f32.xlu0 %v513
  %v525 = vpop.xlane.xlu0 %524
  %526 = vmax.xlane.f32.xlu0 %v514
  %v527 = vpop.xlane.xlu0 %526
  %528 = vmax.xlane.f32.xlu0 %v515
  %v529 = vpop.xlane.xlu0 %528
  %530 = vmax.xlane.f32.xlu0 %v516
  %v531 = vpop.xlane.xlu0 %530
  %532 = vmax.xlane.f32.xlu0 %v517
  %v533 = vpop.xlane.xlu0 %532
  %v534 = vsub.f32 %v510, %v519
  %v535 = vsub.f32 %v511, %v521
  %v536 = vsub.f32 %v512, %v523
  %v537 = vsub.f32 %v513, %v525
  %v538 = vsub.f32 %v514, %v527
  %v539 = vsub.f32 %v515, %v529
  %v540 = vsub.f32 %v516, %v531
  %v541 = vsub.f32 %v517, %v533
  %v542 = vmul.f32 %v534, 1.442695
  %v543 = vpow.pop %v542
  %v544 = vmul.f32 %v535, 1.442695
  %v545 = vpow.pop %v544
  %v546 = vmul.f32 %v536, 1.442695
  %v547 = vpow.pop %v546
  %v548 = vmul.f32 %v537, 1.442695
  %v549 = vpow.pop %v548
  %v550 = vmul.f32 %v538, 1.442695
  %v551 = vpow.pop %v550
  %v552 = vmul.f32 %v539, 1.442695
  %v553 = vpow.pop %v552
  %v554 = vmul.f32 %v540, 1.442695
  %v555 = vpow.pop %v554
  %v556 = vmul.f32 %v541, 1.442695
  %v557 = vpow.pop %v556
  %558 = vadd.xlane.f32.xlu0 %v543
  %v559 = vpop.xlane.xlu0 %558
  %560 = vadd.xlane.f32.xlu0 %v545
  %v561 = vpop.xlane.xlu0 %560
  %562 = vadd.xlane.f32.xlu0 %v547
  %v563 = vpop.xlane.xlu0 %562
  %564 = vadd.xlane.f32.xlu0 %v549
  %v565 = vpop.xlane.xlu0 %564
  %566 = vadd.xlane.f32.xlu0 %v551
  %v567 = vpop.xlane.xlu0 %566
  %568 = vadd.xlane.f32.xlu0 %v553
  %v569 = vpop.xlane.xlu0 %568
  %570 = vadd.xlane.f32.xlu0 %v555
  %v571 = vpop.xlane.xlu0 %570
  %572 = vadd.xlane.f32.xlu0 %v557
  %v573 = vpop.xlane.xlu0 %572
  %v574 = vlog2.pop %v559
  %v575 = vmul.f32 %v574, 0.6931472
  %v576 = vlog2.pop %v561
  %v577 = vmul.f32 %v576, 0.6931472
  %v578 = vlog2.pop %v563
  %v579 = vmul.f32 %v578, 0.6931472
  %v580 = vlog2.pop %v565
  %v581 = vmul.f32 %v580, 0.6931472
  %v582 = vlog2.pop %v567
  %v583 = vmul.f32 %v582, 0.6931472
  %v584 = vlog2.pop %v569
  %v585 = vmul.f32 %v584, 0.6931472
  %v586 = vlog2.pop %v571
  %v587 = vmul.f32 %v586, 0.6931472
  %v588 = vlog2.pop %v573
  %v589 = vmul.f32 %v588, 0.6931472
  %v590 = vsub.f32 %v534, %v575
  %v591 = vsub.f32 %v535, %v577
  %v592 = vsub.f32 %v536, %v579
  %v593 = vsub.f32 %v537, %v581
  %v594 = vsub.f32 %v538, %v583
  %v595 = vsub.f32 %v539, %v585
  %v596 = vsub.f32 %v540, %v587
  %v597 = vsub.f32 %v541, %v589
  %598 = vst [vmem:[%s5] sm:$0xff] %v590
  %599 = vst [vmem:[%s5 + $0x8] sm:$0xff] %v591
  %600 = vst [vmem:[%s5 + $0x10] sm:$0xff] %v592
  %601 = vst [vmem:[%s5 + $0x18] sm:$0xff] %v593
  %602 = vst [vmem:[%s5 + $0x20] sm:$0xff] %v594
  %603 = vst [vmem:[%s5 + $0x28] sm:$0xff] %v595
  %604 = vst [vmem:[%s5 + $0x30] sm:$0xff] %v596
  %605 = vst [vmem:[%s5 + $0x38] sm:$0xff] %v597
  // Predicated region
  $region22: #{brnn_forward.5} parent=0 // pred_check
    _
  $region23: #{brnn_forward.5} parent=0 // pred_check_branch
    %607 = sbr.rel (0) target = $region25
  $region24: #{brnn_forward.5} parent=0 // pred_region
    _
  $region25: #{brnn_forward.5} parent=0 // pred_fallthru
    _
  // Predicated region
  $region26: #{brnn_forward.5} parent=0 // pred_check
    _
  $region27: #{brnn_forward.5} parent=0 // pred_check_branch
    %609 = sbr.rel (0) target = $region29
  $region28: #{brnn_forward.5} parent=0 // pred_region
    _
  $region29: #{brnn_forward.5} parent=0 // pred_fallthru
    _

// kernel: brnn_forward.3
$region0: #{brnn_forward.3}
  #allocation0 [shape = 'u32[]', space=smem, size = 0x4, offset = 0x4, fixed_abs, tag = 'smem constant byte address 0x4 - core index']
  #allocation1 [shape = 'u32[144,128]{1,0:T(1,128)}', space=vmem, size = 0x12000, scoped, tag = 'internal scratch']
  #allocation2 [shape = 'f32[8,256]{1,0:T(8,128)}', space=vmem, size = 0x2000, scoped, tag = 'scratch operand']
  #allocation3 [shape = 'f32[8,256]{1,0:T(8,128)}', space=vmem, size = 0x2000, scoped, tag = 'scratch operand']
  #allocation4 [shape = 'f32[8,256]{1,0:T(8,128)}', space=vmem, size = 0x2000, scoped, tag = 'scratch operand']
  #allocation5 [shape = 'f32[8,256]{1,0:T(8,128)}', space=vmem, size = 0x2000, scoped, tag = 'scratch operand']
  %s0 = inlined_call_operand.vmem [shape: f32[8,8,1024], index: 0, kind: input, shape index: {}]
  %s1 = inlined_call_operand.vmem [shape: f32[8,8,1024], index: 1, kind: input, shape index: {}]
  %s2 = inlined_call_operand.vmem [shape: bf16[256,1024], index: 2, kind: input, shape index: {}]
  %s3 = inlined_call_operand.vmem [shape: bf16[256,1024], index: 3, kind: input, shape index: {}]
  %s4 = inlined_call_operand.vmem [shape: f32[8,8,256], index: 4, kind: output, shape index: {0}]
  %s5 = inlined_call_operand.vmem [shape: f32[8,8,256], index: 5, kind: output, shape index: {1}]
  %6 = xla_tuple %s4, %s5
  %s7 = sld [smem:[#allocation0]]
  $region45: #{brnn_forward.3} parent=0
    _
  %s9 = ssub.s32 1, %s7
  %s10 = scalar_select 0, %s9, %s7
  // Predicated region
  $region2: #{brnn_forward.3} parent=0 // pred_check
    _
  $region3: #{brnn_forward.3} parent=0 // pred_check_branch
    %12 = sbr.rel (0) target = $region5
  $region4: #{brnn_forward.3} parent=0 // pred_region
    _
  $region5: #{brnn_forward.3} parent=0 // pred_fallthru
    _
  // Predicated region
  $region6: #{brnn_forward.3} parent=0 // pred_check
    _
  $region7: #{brnn_forward.3} parent=0 // pred_check_branch
    %14 = sbr.rel (0) target = $region9
  $region8: #{brnn_forward.3} parent=0 // pred_region
    %s15 = ssub.s32 0, 0
    %s16 = smul.u32 8, %s15
    %p17 = scmp.lt.s32.totalorder %s16, 7
    %s18 = scalar_select %p17, %s16, 7
    %s19 = smul.addr %s18, 8
    %s20 = smul.addr %s19, 8
    %s21 = scalar_lea.vmem %s1, %s20
    %s22 = ssub.s32 0, 0
    %s23 = smul.u32 8, %s22
  $region9: #{brnn_forward.3} parent=0 // pred_fallthru
    _
  // Predicated region
  $region10: #{brnn_forward.3} parent=0 // pred_check
    _
  $region11: #{brnn_forward.3} parent=0 // pred_check_branch
    %25 = sbr.rel (0) target = $region13
  $region12: #{brnn_forward.3} parent=0 // pred_region
    _
  $region13: #{brnn_forward.3} parent=0 // pred_fallthru
    _
  // Predicated region
  $region14: #{brnn_forward.3} parent=0 // pred_check
    _
  $region15: #{brnn_forward.3} parent=0 // pred_check_branch
    %27 = sbr.rel (0) target = $region17
  $region16: #{brnn_forward.3} parent=0 // pred_region
    _
  $region17: #{brnn_forward.3} parent=0 // pred_fallthru
    _
  %s28 = ssub.s32 0, 0
  %s29 = smul.u32 8, %s28
  %p30 = scmp.lt.s32.totalorder %s29, 7
  %s31 = scalar_select %p30, %s29, 7
  %s32 = smul.addr %s31, 8
  %s33 = smul.addr %s32, 8
  %s34 = scalar_lea.vmem %s1, %s33
  %s35 = ssub.s32 0, 0
  %s36 = smul.u32 8, %s35
  %p37 = scmp.lt.s32.totalorder %s36, 7
  %s38 = scalar_select %p37, %s36, 7
  %s39 = smul.addr %s38, 2
  %s40 = smul.addr %s39, 8
  %s41 = scalar_lea.vmem %s5, %s40
  %s42 = ssub.s32 0, 0
  %s43 = smul.u32 8, %s42
  %p44 = scmp.lt.s32.totalorder %s43, 7
  %s45 = scalar_select %p44, %s43, 7
  %s46 = smul.addr %s45, 8
  %s47 = smul.addr %s46, 8
  %s48 = scalar_lea.vmem %s1, %s47
  %s49 = ssub.s32 0, 0
  %s50 = smul.u32 8, %s49
  %s51 = ssub.s32 0, 0
  %s52 = smul.u32 8, %s51
  %p53 = scmp.lt.s32.totalorder %s52, 7
  %s54 = scalar_select %p53, %s52, 7
  %s55 = smul.addr %s54, 2
  %s56 = smul.addr %s55, 8
  %s57 = scalar_lea.vmem %s5, %s56
  %s58 = ssub.s32 0, 0
  %s59 = smul.u32 8, %s58
  %p60 = scmp.eq.s32.totalorder 0, 0
  // Predicated region
  $region18: #{brnn_forward.3} parent=0 // pred_check
    %p61 = pneg %p60
  $region19: #{brnn_forward.3} parent=0 // pred_check_branch
    %63 = sbr.rel (%p61) target = $region21
  $region20: #{brnn_forward.3} parent=0 // pred_region
    %64 = vst [vmem:[#allocation2] sm:$0xff] 0.0
    %65 = vst [vmem:[#allocation2 + $0x8] sm:$0xff] 0.0
    %66 = vst [vmem:[#allocation3] sm:$0xff] 0.0
    %67 = vst [vmem:[#allocation3 + $0x8] sm:$0xff] 0.0
    %68 = vst [vmem:[#allocation4] sm:$0xff] 0.0
    %69 = vst [vmem:[#allocation4 + $0x8] sm:$0xff] 0.0
    %70 = vst [vmem:[#allocation5] sm:$0xff] 0.0
    %71 = vst [vmem:[#allocation5 + $0x8] sm:$0xff] 0.0
  $region21: #{brnn_forward.3} parent=0 // pred_fallthru
    _
  loop: start=0, step=1, limit=8
  $region22: #{brnn_forward.3} parent=0 // loop_pre_header
    _
  $region23: #{brnn_forward.3} parent=0 // loop_header
    %s73 = sphi 0, %s77
    %p74 = scmp.ge.s32.totalorder %s73, 8
  $region24: #{brnn_forward.3} parent=0 // loop_header_branch
    %76 = sbr.rel (%p74) target = $region28
  $region25: #{brnn_forward.3} parent=0 // loop_body
    %s78 = smul.u32 %s73, 8
    %s79 = smul.addr %s78, 8
    %s80 = scalar_lea.vmem %s0, %s79
    %v81 = vld [vmem:[%s80] sm:$0xff]
    %v82 = vld [vmem:[%s80 + $0x8] sm:$0xff]
    %v83 = vld [vmem:[%s80 + $0x10] sm:$0xff]
    %v84 = vld [vmem:[%s80 + $0x18] sm:$0xff]
    %v85 = vld [vmem:[%s80 + $0x20] sm:$0xff]
    %v86 = vld [vmem:[%s80 + $0x28] sm:$0xff]
    %v87 = vld [vmem:[%s80 + $0x30] sm:$0xff]
    %v88 = vld [vmem:[%s80 + $0x38] sm:$0xff]
    %v89 = vld [vmem:[#allocation2] sm:$0xff]
    %v90 = vld [vmem:[#allocation2 + $0x8] sm:$0xff]
    %v91 = vld [vmem:[#allocation3] sm:$0xff]
    %v92 = vld [vmem:[#allocation3 + $0x8] sm:$0xff]
    %v93 = vpack.c.bf16 %v89, %v89
    %v94 = vpack.c.bf16 %v90, %v90
    %v95 = vld [vmem:[%s2] sm:$0xff]
    %v96 = vld [vmem:[%s2 + $0x8] sm:$0xff]
    %v97 = vld [vmem:[%s2 + $0x10] sm:$0xff]
    %v98 = vld [vmem:[%s2 + $0x18] sm:$0xff]
    %v99 = vld [vmem:[%s2 + $0x20] sm:$0xff]
    %v100 = vld [vmem:[%s2 + $0x28] sm:$0xff]
    %v101 = vld [vmem:[%s2 + $0x30] sm:$0xff]
    %v102 = vld [vmem:[%s2 + $0x38] sm:$0xff]
    %v103 = vld [vmem:[%s2 + $0x40] sm:$0xff]
    %v104 = vld [vmem:[%s2 + $0x48] sm:$0xff]
    %v105 = vld [vmem:[%s2 + $0x50] sm:$0xff]
    %v106 = vld [vmem:[%s2 + $0x58] sm:$0xff]
    %v107 = vld [vmem:[%s2 + $0x60] sm:$0xff]
    %v108 = vld [vmem:[%s2 + $0x68] sm:$0xff]
    %v109 = vld [vmem:[%s2 + $0x70] sm:$0xff]
    %v110 = vld [vmem:[%s2 + $0x78] sm:$0xff]
    %v111 = vld [vmem:[%s2 + $0x80] sm:$0xff]
    %v112 = vld [vmem:[%s2 + $0x88] sm:$0xff]
    %v113 = vld [vmem:[%s2 + $0x90] sm:$0xff]
    %v114 = vld [vmem:[%s2 + $0x98] sm:$0xff]
    %v115 = vld [vmem:[%s2 + $0xa0] sm:$0xff]
    %v116 = vld [vmem:[%s2 + $0xa8] sm:$0xff]
    %v117 = vld [vmem:[%s2 + $0xb0] sm:$0xff]
    %v118 = vld [vmem:[%s2 + $0xb8] sm:$0xff]
    %v119 = vld [vmem:[%s2 + $0xc0] sm:$0xff]
    %v120 = vld [vmem:[%s2 + $0xc8] sm:$0xff]
    %v121 = vld [vmem:[%s2 + $0xd0] sm:$0xff]
    %v122 = vld [vmem:[%s2 + $0xd8] sm:$0xff]
    %v123 = vld [vmem:[%s2 + $0xe0] sm:$0xff]
    %v124 = vld [vmem:[%s2 + $0xe8] sm:$0xff]
    %v125 = vld [vmem:[%s2 + $0xf0] sm:$0xff]
    %v126 = vld [vmem:[%s2 + $0xf8] sm:$0xff]
    %v127 = vld [vmem:[%s2 + $0x100] sm:$0xff]
    %v128 = vld [vmem:[%s2 + $0x108] sm:$0xff]
    %v129 = vld [vmem:[%s2 + $0x110] sm:$0xff]
    %v130 = vld [vmem:[%s2 + $0x118] sm:$0xff]
    %v131 = vld [vmem:[%s2 + $0x120] sm:$0xff]
    %v132 = vld [vmem:[%s2 + $0x128] sm:$0xff]
    %v133 = vld [vmem:[%s2 + $0x130] sm:$0xff]
    %v134 = vld [vmem:[%s2 + $0x138] sm:$0xff]
    %v135 = vld [vmem:[%s2 + $0x140] sm:$0xff]
    %v136 = vld [vmem:[%s2 + $0x148] sm:$0xff]
    %v137 = vld [vmem:[%s2 + $0x150] sm:$0xff]
    %v138 = vld [vmem:[%s2 + $0x158] sm:$0xff]
    %v139 = vld [vmem:[%s2 + $0x160] sm:$0xff]
    %v140 = vld [vmem:[%s2 + $0x168] sm:$0xff]
    %v141 = vld [vmem:[%s2 + $0x170] sm:$0xff]
    %v142 = vld [vmem:[%s2 + $0x178] sm:$0xff]
    %v143 = vld [vmem:[%s2 + $0x180] sm:$0xff]
    %v144 = vld [vmem:[%s2 + $0x188] sm:$0xff]
    %v145 = vld [vmem:[%s2 + $0x190] sm:$0xff]
    %v146 = vld [vmem:[%s2 + $0x198] sm:$0xff]
    %v147 = vld [vmem:[%s2 + $0x1a0] sm:$0xff]
    %v148 = vld [vmem:[%s2 + $0x1a8] sm:$0xff]
    %v149 = vld [vmem:[%s2 + $0x1b0] sm:$0xff]
    %v150 = vld [vmem:[%s2 + $0x1b8] sm:$0xff]
    %v151 = vld [vmem:[%s2 + $0x1c0] sm:$0xff]
    %v152 = vld [vmem:[%s2 + $0x1c8] sm:$0xff]
    %v153 = vld [vmem:[%s2 + $0x1d0] sm:$0xff]
    %v154 = vld [vmem:[%s2 + $0x1d8] sm:$0xff]
    %v155 = vld [vmem:[%s2 + $0x1e0] sm:$0xff]
    %v156 = vld [vmem:[%s2 + $0x1e8] sm:$0xff]
    %v157 = vld [vmem:[%s2 + $0x1f0] sm:$0xff]
    %v158 = vld [vmem:[%s2 + $0x1f8] sm:$0xff]
    %v159 = vld [vmem:[%s2 + $0x200] sm:$0xff]
    %v160 = vld [vmem:[%s2 + $0x208] sm:$0xff]
    %v161 = vld [vmem:[%s2 + $0x210] sm:$0xff]
    %v162 = vld [vmem:[%s2 + $0x218] sm:$0xff]
    %v163 = vld [vmem:[%s2 + $0x220] sm:$0xff]
    %v164 = vld [vmem:[%s2 + $0x228] sm:$0xff]
    %v165 = vld [vmem:[%s2 + $0x230] sm:$0xff]
    %v166 = vld [vmem:[%s2 + $0x238] sm:$0xff]
    %v167 = vld [vmem:[%s2 + $0x240] sm:$0xff]
    %v168 = vld [vmem:[%s2 + $0x248] sm:$0xff]
    %v169 = vld [vmem:[%s2 + $0x250] sm:$0xff]
    %v170 = vld [vmem:[%s2 + $0x258] sm:$0xff]
    %v171 = vld [vmem:[%s2 + $0x260] sm:$0xff]
    %v172 = vld [vmem:[%s2 + $0x268] sm:$0xff]
    %v173 = vld [vmem:[%s2 + $0x270] sm:$0xff]
    %v174 = vld [vmem:[%s2 + $0x278] sm:$0xff]
    %v175 = vld [vmem:[%s2 + $0x280] sm:$0xff]
    %v176 = vld [vmem:[%s2 + $0x288] sm:$0xff]
    %v177 = vld [vmem:[%s2 + $0x290] sm:$0xff]
    %v178 = vld [vmem:[%s2 + $0x298] sm:$0xff]
    %v179 = vld [vmem:[%s2 + $0x2a0] sm:$0xff]
    %v180 = vld [vmem:[%s2 + $0x2a8] sm:$0xff]
    %v181 = vld [vmem:[%s2 + $0x2b0] sm:$0xff]
    %v182 = vld [vmem:[%s2 + $0x2b8] sm:$0xff]
    %v183 = vld [vmem:[%s2 + $0x2c0] sm:$0xff]
    %v184 = vld [vmem:[%s2 + $0x2c8] sm:$0xff]
    %v185 = vld [vmem:[%s2 + $0x2d0] sm:$0xff]
    %v186 = vld [vmem:[%s2 + $0x2d8] sm:$0xff]
    %v187 = vld [vmem:[%s2 + $0x2e0] sm:$0xff]
    %v188 = vld [vmem:[%s2 + $0x2e8] sm:$0xff]
    %v189 = vld [vmem:[%s2 + $0x2f0] sm:$0xff]
    %v190 = vld [vmem:[%s2 + $0x2f8] sm:$0xff]
    %v191 = vld [vmem:[%s2 + $0x300] sm:$0xff]
    %v192 = vld [vmem:[%s2 + $0x308] sm:$0xff]
    %v193 = vld [vmem:[%s2 + $0x310] sm:$0xff]
    %v194 = vld [vmem:[%s2 + $0x318] sm:$0xff]
    %v195 = vld [vmem:[%s2 + $0x320] sm:$0xff]
    %v196 = vld [vmem:[%s2 + $0x328] sm:$0xff]
    %v197 = vld [vmem:[%s2 + $0x330] sm:$0xff]
    %v198 = vld [vmem:[%s2 + $0x338] sm:$0xff]
    %v199 = vld [vmem:[%s2 + $0x340] sm:$0xff]
    %v200 = vld [vmem:[%s2 + $0x348] sm:$0xff]
    %v201 = vld [vmem:[%s2 + $0x350] sm:$0xff]
    %v202 = vld [vmem:[%s2 + $0x358] sm:$0xff]
    %v203 = vld [vmem:[%s2 + $0x360] sm:$0xff]
    %v204 = vld [vmem:[%s2 + $0x368] sm:$0xff]
    %v205 = vld [vmem:[%s2 + $0x370] sm:$0xff]
    %v206 = vld [vmem:[%s2 + $0x378] sm:$0xff]
    %v207 = vld [vmem:[%s2 + $0x380] sm:$0xff]
    %v208 = vld [vmem:[%s2 + $0x388] sm:$0xff]
    %v209 = vld [vmem:[%s2 + $0x390] sm:$0xff]
    %v210 = vld [vmem:[%s2 + $0x398] sm:$0xff]
    %v211 = vld [vmem:[%s2 + $0x3a0] sm:$0xff]
    %v212 = vld [vmem:[%s2 + $0x3a8] sm:$0xff]
    %v213 = vld [vmem:[%s2 + $0x3b0] sm:$0xff]
    %v214 = vld [vmem:[%s2 + $0x3b8] sm:$0xff]
    %v215 = vld [vmem:[%s2 + $0x3c0] sm:$0xff]
    %v216 = vld [vmem:[%s2 + $0x3c8] sm:$0xff]
    %v217 = vld [vmem:[%s2 + $0x3d0] sm:$0xff]
    %v218 = vld [vmem:[%s2 + $0x3d8] sm:$0xff]
    %v219 = vld [vmem:[%s2 + $0x3e0] sm:$0xff]
    %v220 = vld [vmem:[%s2 + $0x3e8] sm:$0xff]
    %v221 = vld [vmem:[%s2 + $0x3f0] sm:$0xff]
    %v222 = vld [vmem:[%s2 + $0x3f8] sm:$0xff]
    %v351 = vunpack.c.l.b16 %v95
    %v352 = vunpack.c.h.b16 %v95
    %v353 = vunpack.c.l.b16 %v96
    %v354 = vunpack.c.h.b16 %v96
    %v355 = vunpack.c.l.b16 %v97
    %v356 = vunpack.c.h.b16 %v97
    %v357 = vunpack.c.l.b16 %v98
    %v358 = vunpack.c.h.b16 %v98
    %v359 = vunpack.c.l.b16 %v99
    %v360 = vunpack.c.h.b16 %v99
    %v361 = vunpack.c.l.b16 %v100
    %v362 = vunpack.c.h.b16 %v100
    %v363 = vunpack.c.l.b16 %v101
    %v364 = vunpack.c.h.b16 %v101
    %v365 = vunpack.c.l.b16 %v102
    %v366 = vunpack.c.h.b16 %v102
    %v367 = vunpack.c.l.b16 %v103
    %v368 = vunpack.c.h.b16 %v103
    %v369 = vunpack.c.l.b16 %v104
    %v370 = vunpack.c.h.b16 %v104
    %v371 = vunpack.c.l.b16 %v105
    %v372 = vunpack.c.h.b16 %v105
    %v373 = vunpack.c.l.b16 %v106
    %v374 = vunpack.c.h.b16 %v106
    %v375 = vunpack.c.l.b16 %v107
    %v376 = vunpack.c.h.b16 %v107
    %v377 = vunpack.c.l.b16 %v108
    %v378 = vunpack.c.h.b16 %v108
    %v379 = vunpack.c.l.b16 %v109
    %v380 = vunpack.c.h.b16 %v109
    %v381 = vunpack.c.l.b16 %v110
    %v382 = vunpack.c.h.b16 %v110
    %v383 = vunpack.c.l.b16 %v111
    %v384 = vunpack.c.h.b16 %v111
    %v385 = vunpack.c.l.b16 %v112
    %v386 = vunpack.c.h.b16 %v112
    %v387 = vunpack.c.l.b16 %v113
    %v388 = vunpack.c.h.b16 %v113
    %v389 = vunpack.c.l.b16 %v114
    %v390 = vunpack.c.h.b16 %v114
    %v391 = vunpack.c.l.b16 %v115
    %v392 = vunpack.c.h.b16 %v115
    %v393 = vunpack.c.l.b16 %v116
    %v394 = vunpack.c.h.b16 %v116
    %v395 = vunpack.c.l.b16 %v117
    %v396 = vunpack.c.h.b16 %v117
    %v397 = vunpack.c.l.b16 %v118
    %v398 = vunpack.c.h.b16 %v118
    %v399 = vunpack.c.l.b16 %v119
    %v400 = vunpack.c.h.b16 %v119
    %v401 = vunpack.c.l.b16 %v120
    %v402 = vunpack.c.h.b16 %v120
    %v403 = vunpack.c.l.b16 %v121
    %v404 = vunpack.c.h.b16 %v121
    %v405 = vunpack.c.l.b16 %v122
    %v406 = vunpack.c.h.b16 %v122
    %v407 = vunpack.c.l.b16 %v123
    %v408 = vunpack.c.h.b16 %v123
    %v409 = vunpack.c.l.b16 %v124
    %v410 = vunpack.c.h.b16 %v124
    %v411 = vunpack.c.l.b16 %v125
    %v412 = vunpack.c.h.b16 %v125
    %v413 = vunpack.c.l.b16 %v126
    %v414 = vunpack.c.h.b16 %v126
    %v415 = vunpack.c.l.b16 %v127
    %v416 = vunpack.c.h.b16 %v127
    %v417 = vunpack.c.l.b16 %v128
    %v418 = vunpack.c.h.b16 %v128
    %v419 = vunpack.c.l.b16 %v129
    %v420 = vunpack.c.h.b16 %v129
    %v421 = vunpack.c.l.b16 %v130
    %v422 = vunpack.c.h.b16 %v130
    %v423 = vunpack.c.l.b16 %v131
    %v424 = vunpack.c.h.b16 %v131
    %v425 = vunpack.c.l.b16 %v132
    %v426 = vunpack.c.h.b16 %v132
    %v427 = vunpack.c.l.b16 %v133
    %v428 = vunpack.c.h.b16 %v133
    %v429 = vunpack.c.l.b16 %v134
    %v430 = vunpack.c.h.b16 %v134
    %v431 = vunpack.c.l.b16 %v135
    %v432 = vunpack.c.h.b16 %v135
    %v433 = vunpack.c.l.b16 %v136
    %v434 = vunpack.c.h.b16 %v136
    %v435 = vunpack.c.l.b16 %v137
    %v436 = vunpack.c.h.b16 %v137
    %v437 = vunpack.c.l.b16 %v138
    %v438 = vunpack.c.h.b16 %v138
    %v439 = vunpack.c.l.b16 %v139
    %v440 = vunpack.c.h.b16 %v139
    %v441 = vunpack.c.l.b16 %v140
    %v442 = vunpack.c.h.b16 %v140
    %v443 = vunpack.c.l.b16 %v141
    %v444 = vunpack.c.h.b16 %v141
    %v445 = vunpack.c.l.b16 %v142
    %v446 = vunpack.c.h.b16 %v142
    %v447 = vunpack.c.l.b16 %v143
    %v448 = vunpack.c.h.b16 %v143
    %v449 = vunpack.c.l.b16 %v144
    %v450 = vunpack.c.h.b16 %v144
    %v451 = vunpack.c.l.b16 %v145
    %v452 = vunpack.c.h.b16 %v145
    %v453 = vunpack.c.l.b16 %v146
    %v454 = vunpack.c.h.b16 %v146
    %v455 = vunpack.c.l.b16 %v147
    %v456 = vunpack.c.h.b16 %v147
    %v457 = vunpack.c.l.b16 %v148
    %v458 = vunpack.c.h.b16 %v148
    %v459 = vunpack.c.l.b16 %v149
    %v460 = vunpack.c.h.b16 %v149
    %v461 = vunpack.c.l.b16 %v150
    %v462 = vunpack.c.h.b16 %v150
    %v463 = vunpack.c.l.b16 %v151
    %v464 = vunpack.c.h.b16 %v151
    %v465 = vunpack.c.l.b16 %v152
    %v466 = vunpack.c.h.b16 %v152
    %v467 = vunpack.c.l.b16 %v153
    %v468 = vunpack.c.h.b16 %v153
    %v469 = vunpack.c.l.b16 %v154
    %v470 = vunpack.c.h.b16 %v154
    %v471 = vunpack.c.l.b16 %v155
    %v472 = vunpack.c.h.b16 %v155
    %v473 = vunpack.c.l.b16 %v156
    %v474 = vunpack.c.h.b16 %v156
    %v475 = vunpack.c.l.b16 %v157
    %v476 = vunpack.c.h.b16 %v157
    %v477 = vunpack.c.l.b16 %v158
    %v478 = vunpack.c.h.b16 %v158
    %v479 = vunpack.c.l.b16 %v159
    %v480 = vunpack.c.h.b16 %v159
    %v481 = vunpack.c.l.b16 %v160
    %v482 = vunpack.c.h.b16 %v160
    %v483 = vunpack.c.l.b16 %v161
    %v484 = vunpack.c.h.b16 %v161
    %v485 = vunpack.c.l.b16 %v162
    %v486 = vunpack.c.h.b16 %v162
    %v487 = vunpack.c.l.b16 %v163
    %v488 = vunpack.c.h.b16 %v163
    %v489 = vunpack.c.l.b16 %v164
    %v490 = vunpack.c.h.b16 %v164
    %v491 = vunpack.c.l.b16 %v165
    %v492 = vunpack.c.h.b16 %v165
    %v493 = vunpack.c.l.b16 %v166
    %v494 = vunpack.c.h.b16 %v166
    %v495 = vunpack.c.l.b16 %v167
    %v496 = vunpack.c.h.b16 %v167
    %v497 = vunpack.c.l.b16 %v168
    %v498 = vunpack.c.h.b16 %v168
    %v499 = vunpack.c.l.b16 %v169
    %v500 = vunpack.c.h.b16 %v169
    %v501 = vunpack.c.l.b16 %v170
    %v502 = vunpack.c.h.b16 %v170
    %v503 = vunpack.c.l.b16 %v171
    %v504 = vunpack.c.h.b16 %v171
    %v505 = vunpack.c.l.b16 %v172
    %v506 = vunpack.c.h.b16 %v172
    %v507 = vunpack.c.l.b16 %v173
    %v508 = vunpack.c.h.b16 %v173
    %v509 = vunpack.c.l.b16 %v174
    %v510 = vunpack.c.h.b16 %v174
    %v511 = vunpack.c.l.b16 %v175
    %v512 = vunpack.c.h.b16 %v175
    %v513 = vunpack.c.l.b16 %v176
    %v514 = vunpack.c.h.b16 %v176
    %v515 = vunpack.c.l.b16 %v177
    %v516 = vunpack.c.h.b16 %v177
    %v517 = vunpack.c.l.b16 %v178
    %v518 = vunpack.c.h.b16 %v178
    %v519 = vunpack.c.l.b16 %v179
    %v520 = vunpack.c.h.b16 %v179
    %v521 = vunpack.c.l.b16 %v180
    %v522 = vunpack.c.h.b16 %v180
    %v523 = vunpack.c.l.b16 %v181
    %v524 = vunpack.c.h.b16 %v181
    %v525 = vunpack.c.l.b16 %v182
    %v526 = vunpack.c.h.b16 %v182
    %v527 = vunpack.c.l.b16 %v183
    %v528 = vunpack.c.h.b16 %v183
    %v529 = vunpack.c.l.b16 %v184
    %v530 = vunpack.c.h.b16 %v184
    %v531 = vunpack.c.l.b16 %v185
    %v532 = vunpack.c.h.b16 %v185
    %v533 = vunpack.c.l.b16 %v186
    %v534 = vunpack.c.h.b16 %v186
    %v535 = vunpack.c.l.b16 %v187
    %v536 = vunpack.c.h.b16 %v187
    %v537 = vunpack.c.l.b16 %v188
    %v538 = vunpack.c.h.b16 %v188
    %v539 = vunpack.c.l.b16 %v189
    %v540 = vunpack.c.h.b16 %v189
    %v541 = vunpack.c.l.b16 %v190
    %v542 = vunpack.c.h.b16 %v190
    %v543 = vunpack.c.l.b16 %v191
    %v544 = vunpack.c.h.b16 %v191
    %v545 = vunpack.c.l.b16 %v192
    %v546 = vunpack.c.h.b16 %v192
    %v547 = vunpack.c.l.b16 %v193
    %v548 = vunpack.c.h.b16 %v193
    %v549 = vunpack.c.l.b16 %v194
    %v550 = vunpack.c.h.b16 %v194
    %v551 = vunpack.c.l.b16 %v195
    %v552 = vunpack.c.h.b16 %v195
    %v553 = vunpack.c.l.b16 %v196
    %v554 = vunpack.c.h.b16 %v196
    %v555 = vunpack.c.l.b16 %v197
    %v556 = vunpack.c.h.b16 %v197
    %v557 = vunpack.c.l.b16 %v198
    %v558 = vunpack.c.h.b16 %v198
    %v559 = vunpack.c.l.b16 %v199
    %v560 = vunpack.c.h.b16 %v199
    %v561 = vunpack.c.l.b16 %v200
    %v562 = vunpack.c.h.b16 %v200
    %v563 = vunpack.c.l.b16 %v201
    %v564 = vunpack.c.h.b16 %v201
    %v565 = vunpack.c.l.b16 %v202
    %v566 = vunpack.c.h.b16 %v202
    %v567 = vunpack.c.l.b16 %v203
    %v568 = vunpack.c.h.b16 %v203
    %v569 = vunpack.c.l.b16 %v204
    %v570 = vunpack.c.h.b16 %v204
    %v571 = vunpack.c.l.b16 %v205
    %v572 = vunpack.c.h.b16 %v205
    %v573 = vunpack.c.l.b16 %v206
    %v574 = vunpack.c.h.b16 %v206
    %v575 = vunpack.c.l.b16 %v207
    %v576 = vunpack.c.h.b16 %v207
    %v577 = vunpack.c.l.b16 %v208
    %v578 = vunpack.c.h.b16 %v208
    %v579 = vunpack.c.l.b16 %v209
    %v580 = vunpack.c.h.b16 %v209
    %v581 = vunpack.c.l.b16 %v210
    %v582 = vunpack.c.h.b16 %v210
    %v583 = vunpack.c.l.b16 %v211
    %v584 = vunpack.c.h.b16 %v211
    %v585 = vunpack.c.l.b16 %v212
    %v586 = vunpack.c.h.b16 %v212
    %v587 = vunpack.c.l.b16 %v213
    %v588 = vunpack.c.h.b16 %v213
    %v589 = vunpack.c.l.b16 %v214
    %v590 = vunpack.c.h.b16 %v214
    %v591 = vunpack.c.l.b16 %v215
    %v592 = vunpack.c.h.b16 %v215
    %v593 = vunpack.c.l.b16 %v216
    %v594 = vunpack.c.h.b16 %v216
    %v595 = vunpack.c.l.b16 %v217
    %v596 = vunpack.c.h.b16 %v217
    %v597 = vunpack.c.l.b16 %v218
    %v598 = vunpack.c.h.b16 %v218
    %v599 = vunpack.c.l.b16 %v219
    %v600 = vunpack.c.h.b16 %v219
    %v601 = vunpack.c.l.b16 %v220
    %v602 = vunpack.c.h.b16 %v220
    %v603 = vunpack.c.l.b16 %v221
    %v604 = vunpack.c.h.b16 %v221
    %v605 = vunpack.c.l.b16 %v222
    %v606 = vunpack.c.h.b16 %v222
    %v607 = vpack.c.b16 %v359, %v351
    %v608 = vpack.c.b16 %v360, %v352
    %v609 = vpack.c.b16 %v361, %v353
    %v610 = vpack.c.b16 %v362, %v354
    %v611 = vpack.c.b16 %v363, %v355
    %v612 = vpack.c.b16 %v364, %v356
    %v613 = vpack.c.b16 %v365, %v357
    %v614 = vpack.c.b16 %v366, %v358
    %v615 = vpack.c.b16 %v375, %v367
    %v616 = vpack.c.b16 %v376, %v368
    %v617 = vpack.c.b16 %v377, %v369
    %v618 = vpack.c.b16 %v378, %v370
    %v619 = vpack.c.b16 %v379, %v371
    %v620 = vpack.c.b16 %v380, %v372
    %v621 = vpack.c.b16 %v381, %v373
    %v622 = vpack.c.b16 %v382, %v374
    %v623 = vpack.c.b16 %v391, %v383
    %v624 = vpack.c.b16 %v392, %v384
    %v625 = vpack.c.b16 %v393, %v385
    %v626 = vpack.c.b16 %v394, %v386
    %v627 = vpack.c.b16 %v395, %v387
    %v628 = vpack.c.b16 %v396, %v388
    %v629 = vpack.c.b16 %v397, %v389
    %v630 = vpack.c.b16 %v398, %v390
    %v631 = vpack.c.b16 %v407, %v399
    %v632 = vpack.c.b16 %v408, %v400
    %v633 = vpack.c.b16 %v409, %v401
    %v634 = vpack.c.b16 %v410, %v402
    %v635 = vpack.c.b16 %v411, %v403
    %v636 = vpack.c.b16 %v412, %v404
    %v637 = vpack.c.b16 %v413, %v405
    %v638 = vpack.c.b16 %v414, %v406
    %v639 = vpack.c.b16 %v423, %v415
    %v640 = vpack.c.b16 %v424, %v416
    %v641 = vpack.c.b16 %v425, %v417
    %v642 = vpack.c.b16 %v426, %v418
    %v643 = vpack.c.b16 %v427, %v419
    %v644 = vpack.c.b16 %v428, %v420
    %v645 = vpack.c.b16 %v429, %v421
    %v646 = vpack.c.b16 %v430, %v422
    %v647 = vpack.c.b16 %v439, %v431
    %v648 = vpack.c.b16 %v440, %v432
    %v649 = vpack.c.b16 %v441, %v433
    %v650 = vpack.c.b16 %v442, %v434
    %v651 = vpack.c.b16 %v443, %v435
    %v652 = vpack.c.b16 %v444, %v436
    %v653 = vpack.c.b16 %v445, %v437
    %v654 = vpack.c.b16 %v446, %v438
    %v655 = vpack.c.b16 %v455, %v447
    %v656 = vpack.c.b16 %v456, %v448
    %v657 = vpack.c.b16 %v457, %v449
    %v658 = vpack.c.b16 %v458, %v450
    %v659 = vpack.c.b16 %v459, %v451
    %v660 = vpack.c.b16 %v460, %v452
    %v661 = vpack.c.b16 %v461, %v453
    %v662 = vpack.c.b16 %v462, %v454
    %v663 = vpack.c.b16 %v471, %v463
    %v664 = vpack.c.b16 %v472, %v464
    %v665 = vpack.c.b16 %v473, %v465
    %v666 = vpack.c.b16 %v474, %v466
    %v667 = vpack.c.b16 %v475, %v467
    %v668 = vpack.c.b16 %v476, %v468
    %v669 = vpack.c.b16 %v477, %v469
    %v670 = vpack.c.b16 %v478, %v470
    %v671 = vpack.c.b16 %v487, %v479
    %v672 = vpack.c.b16 %v488, %v480
    %v673 = vpack.c.b16 %v489, %v481
    %v674 = vpack.c.b16 %v490, %v482
    %v675 = vpack.c.b16 %v491, %v483
    %v676 = vpack.c.b16 %v492, %v484
    %v677 = vpack.c.b16 %v493, %v485
    %v678 = vpack.c.b16 %v494, %v486
    %v679 = vpack.c.b16 %v503, %v495
    %v680 = vpack.c.b16 %v504, %v496
    %v681 = vpack.c.b16 %v505, %v497
    %v682 = vpack.c.b16 %v506, %v498
    %v683 = vpack.c.b16 %v507, %v499
    %v684 = vpack.c.b16 %v508, %v500
    %v685 = vpack.c.b16 %v509, %v501
    %v686 = vpack.c.b16 %v510, %v502
    %v687 = vpack.c.b16 %v519, %v511
    %v688 = vpack.c.b16 %v520, %v512
    %v689 = vpack.c.b16 %v521, %v513
    %v690 = vpack.c.b16 %v522, %v514
    %v691 = vpack.c.b16 %v523, %v515
    %v692 = vpack.c.b16 %v524, %v516
    %v693 = vpack.c.b16 %v525, %v517
    %v694 = vpack.c.b16 %v526, %v518
    %v695 = vpack.c.b16 %v535, %v527
    %v696 = vpack.c.b16 %v536, %v528
    %v697 = vpack.c.b16 %v537, %v529
    %v698 = vpack.c.b16 %v538, %v530
    %v699 = vpack.c.b16 %v539, %v531
    %v700 = vpack.c.b16 %v540, %v532
    %v701 = vpack.c.b16 %v541, %v533
    %v702 = vpack.c.b16 %v542, %v534
    %v703 = vpack.c.b16 %v551, %v543
    %v704 = vpack.c.b16 %v552, %v544
    %v705 = vpack.c.b16 %v553, %v545
    %v706 = vpack.c.b16 %v554, %v546
    %v707 = vpack.c.b16 %v555, %v547
    %v708 = vpack.c.b16 %v556, %v548
    %v709 = vpack.c.b16 %v557, %v549
    %v710 = vpack.c.b16 %v558, %v550
    %v711 = vpack.c.b16 %v567, %v559
    %v712 = vpack.c.b16 %v568, %v560
    %v713 = vpack.c.b16 %v569, %v561
    %v714 = vpack.c.b16 %v570, %v562
    %v715 = vpack.c.b16 %v571, %v563
    %v716 = vpack.c.b16 %v572, %v564
    %v717 = vpack.c.b16 %v573, %v565
    %v718 = vpack.c.b16 %v574, %v566
    %v719 = vpack.c.b16 %v583, %v575
    %v720 = vpack.c.b16 %v584, %v576
    %v721 = vpack.c.b16 %v585, %v577
    %v722 = vpack.c.b16 %v586, %v578
    %v723 = vpack.c.b16 %v587, %v579
    %v724 = vpack.c.b16 %v588, %v580
    %v725 = vpack.c.b16 %v589, %v581
    %v726 = vpack.c.b16 %v590, %v582
    %v727 = vpack.c.b16 %v599, %v591
    %v728 = vpack.c.b16 %v600, %v592
    %v729 = vpack.c.b16 %v601, %v593
    %v730 = vpack.c.b16 %v602, %v594
    %v731 = vpack.c.b16 %v603, %v595
    %v732 = vpack.c.b16 %v604, %v596
    %v733 = vpack.c.b16 %v605, %v597
    %v734 = vpack.c.b16 %v606, %v598
    %863 = vmatprep.subr.bf16.mxu0 %v608
    %864 = vmatpush1.bf16.msra.mxu0 %v607
    %865 = vmatprep.subr.bf16.mxu0 %v616
    %866 = vmatpush1.bf16.msra.mxu0 %v615
    %867 = vmatprep.subr.bf16.mxu0 %v624
    %868 = vmatpush1.bf16.msra.mxu0 %v623
    %869 = vmatprep.subr.bf16.mxu0 %v632
    %870 = vmatpush1.bf16.msra.mxu0 %v631
    %871 = vmatprep.subr.bf16.mxu0 %v640
    %872 = vmatpush1.bf16.msra.mxu0 %v639
    %873 = vmatprep.subr.bf16.mxu0 %v648
    %874 = vmatpush1.bf16.msra.mxu0 %v647
    %875 = vmatprep.subr.bf16.mxu0 %v656
    %876 = vmatpush1.bf16.msra.mxu0 %v655
    %877 = vmatprep.subr.bf16.mxu0 %v664
    %878 = vmatpush1.bf16.msra.mxu0 %v663
    %879 = vmatprep.subr.bf16.mxu0 %v672
    %880 = vmatpush1.bf16.msra.mxu0 %v671
    %881 = vmatprep.subr.bf16.mxu0 %v680
    %882 = vmatpush1.bf16.msra.mxu0 %v679
    %883 = vmatprep.subr.bf16.mxu0 %v688
    %884 = vmatpush1.bf16.msra.mxu0 %v687
    %885 = vmatprep.subr.bf16.mxu0 %v696
    %886 = vmatpush1.bf16.msra.mxu0 %v695
    %887 = vmatprep.subr.bf16.mxu0 %v704
    %888 = vmatpush1.bf16.msra.mxu0 %v703
    %889 = vmatprep.subr.bf16.mxu0 %v712
    %890 = vmatpush1.bf16.msra.mxu0 %v711
    %891 = vmatprep.subr.bf16.mxu0 %v720
    %892 = vmatpush1.bf16.msra.mxu0 %v719
    %893 = vmatprep.subr.bf16.mxu0 %v728
    %894 = vmatpush1.bf16.msra.mxu0 %v727
    %895 = vmatprep.mubr.bf16.mxu0 %v94
    %896 = vmatmul.mubr.bf16.gmra.mrb[0].mxu0 %v93
    %v897 = vpop.f32.mrb[0].mxu0
    %v898 = vadd.f32 0.0, %v897
    %v899 = vpop.f32.mrb[0].mxu0
    %v900 = vadd.f32 0.0, %v899
    %v901 = vpop.f32.mrb[0].mxu0
    %v902 = vpop.f32.mrb[0].mxu0
    %903 = vdwg.mxu0
    %904 = vmatprep.subr.bf16.mxu0 %v610
    %905 = vmatpush1.bf16.msra.mxu0 %v609
    %906 = vmatprep.subr.bf16.mxu0 %v618
    %907 = vmatpush1.bf16.msra.mxu0 %v617
    %908 = vmatprep.subr.bf16.mxu0 %v626
    %909 = vmatpush1.bf16.msra.mxu0 %v625
    %910 = vmatprep.subr.bf16.mxu0 %v634
    %911 = vmatpush1.bf16.msra.mxu0 %v633
    %912 = vmatprep.subr.bf16.mxu0 %v642
    %913 = vmatpush1.bf16.msra.mxu0 %v641
    %914 = vmatprep.subr.bf16.mxu0 %v650
    %915 = vmatpush1.bf16.msra.mxu0 %v649
    %916 = vmatprep.subr.bf16.mxu0 %v658
    %917 = vmatpush1.bf16.msra.mxu0 %v657
    %918 = vmatprep.subr.bf16.mxu0 %v666
    %919 = vmatpush1.bf16.msra.mxu0 %v665
    %920 = vmatprep.subr.bf16.mxu0 %v674
    %921 = vmatpush1.bf16.msra.mxu0 %v673
    %922 = vmatprep.subr.bf16.mxu0 %v682
    %923 = vmatpush1.bf16.msra.mxu0 %v681
    %924 = vmatprep.subr.bf16.mxu0 %v690
    %925 = vmatpush1.bf16.msra.mxu0 %v689
    %926 = vmatprep.subr.bf16.mxu0 %v698
    %927 = vmatpush1.bf16.msra.mxu0 %v697
    %928 = vmatprep.subr.bf16.mxu0 %v706
    %929 = vmatpush1.bf16.msra.mxu0 %v705
    %930 = vmatprep.subr.bf16.mxu0 %v714
    %931 = vmatpush1.bf16.msra.mxu0 %v713
    %932 = vmatprep.subr.bf16.mxu0 %v722
    %933 = vmatpush1.bf16.msra.mxu0 %v721
    %934 = vmatprep.subr.bf16.mxu0 %v730
    %935 = vmatpush1.bf16.msra.mxu0 %v729
    %936 = vmatprep.mubr.bf16.mxu0 %v94
    %937 = vmatmul.mubr.bf16.gmra.mrb[0].mxu0 %v93
    %v938 = vpop.f32.mrb[0].mxu0
    %v939 = vadd.f32 0.0, %v938
    %v940 = vpop.f32.mrb[0].mxu0
    %v941 = vadd.f32 0.0, %v940
    %v942 = vpop.f32.mrb[0].mxu0
    %v943 = vpop.f32.mrb[0].mxu0
    %944 = vdwg.mxu0
    %945 = vmatprep.subr.bf16.mxu0 %v612
    %946 = vmatpush1.bf16.msra.mxu0 %v611
    %947 = vmatprep.subr.bf16.mxu0 %v620
    %948 = vmatpush1.bf16.msra.mxu0 %v619
    %949 = vmatprep.subr.bf16.mxu0 %v628
    %950 = vmatpush1.bf16.msra.mxu0 %v627
    %951 = vmatprep.subr.bf16.mxu0 %v636
    %952 = vmatpush1.bf16.msra.mxu0 %v635
    %953 = vmatprep.subr.bf16.mxu0 %v644
    %954 = vmatpush1.bf16.msra.mxu0 %v643
    %955 = vmatprep.subr.bf16.mxu0 %v652
    %956 = vmatpush1.bf16.msra.mxu0 %v651
    %957 = vmatprep.subr.bf16.mxu0 %v660
    %958 = vmatpush1.bf16.msra.mxu0 %v659
    %959 = vmatprep.subr.bf16.mxu0 %v668
    %960 = vmatpush1.bf16.msra.mxu0 %v667
    %961 = vmatprep.subr.bf16.mxu0 %v676
    %962 = vmatpush1.bf16.msra.mxu0 %v675
    %963 = vmatprep.subr.bf16.mxu0 %v684
    %964 = vmatpush1.bf16.msra.mxu0 %v683
    %965 = vmatprep.subr.bf16.mxu0 %v692
    %966 = vmatpush1.bf16.msra.mxu0 %v691
    %967 = vmatprep.subr.bf16.mxu0 %v700
    %968 = vmatpush1.bf16.msra.mxu0 %v699
    %969 = vmatprep.subr.bf16.mxu0 %v708
    %970 = vmatpush1.bf16.msra.mxu0 %v707
    %971 = vmatprep.subr.bf16.mxu0 %v716
    %972 = vmatpush1.bf16.msra.mxu0 %v715
    %973 = vmatprep.subr.bf16.mxu0 %v724
    %974 = vmatpush1.bf16.msra.mxu0 %v723
    %975 = vmatprep.subr.bf16.mxu0 %v732
    %976 = vmatpush1.bf16.msra.mxu0 %v731
    %977 = vmatprep.mubr.bf16.mxu0 %v94
    %978 = vmatmul.mubr.bf16.gmra.mrb[0].mxu0 %v93
    %v979 = vpop.f32.mrb[0].mxu0
    %v980 = vadd.f32 0.0, %v979
    %v981 = vpop.f32.mrb[0].mxu0
    %v982 = vadd.f32 0.0, %v981
    %v983 = vpop.f32.mrb[0].mxu0
    %v984 = vpop.f32.mrb[0].mxu0
    %985 = vdwg.mxu0
    %986 = vmatprep.subr.bf16.mxu0 %v614
    %987 = vmatpush1.bf16.msra.mxu0 %v613
    %988 = vmatprep.subr.bf16.mxu0 %v622
    %989 = vmatpush1.bf16.msra.mxu0 %v621
    %990 = vmatprep.subr.bf16.mxu0 %v630
    %991 = vmatpush1.bf16.msra.mxu0 %v629
    %992 = vmatprep.subr.bf16.mxu0 %v638
    %993 = vmatpush1.bf16.msra.mxu0 %v637
    %994 = vmatprep.subr.bf16.mxu0 %v646
    %995 = vmatpush1.bf16.msra.mxu0 %v645
    %996 = vmatprep.subr.bf16.mxu0 %v654
    %997 = vmatpush1.bf16.msra.mxu0 %v653
    %998 = vmatprep.subr.bf16.mxu0 %v662
    %999 = vmatpush1.bf16.msra.mxu0 %v661
    %1000 = vmatprep.subr.bf16.mxu0 %v670
    %1001 = vmatpush1.bf16.msra.mxu0 %v669
    %1002 = vmatprep.subr.bf16.mxu0 %v678
    %1003 = vmatpush1.bf16.msra.mxu0 %v677
    %1004 = vmatprep.subr.bf16.mxu0 %v686
    %1005 = vmatpush1.bf16.msra.mxu0 %v685
    %1006 = vmatprep.subr.bf16.mxu0 %v694
    %1007 = vmatpush1.bf16.msra.mxu0 %v693
    %1008 = vmatprep.subr.bf16.mxu0 %v702
    %1009 = vmatpush1.bf16.msra.mxu0 %v701
    %1010 = vmatprep.subr.bf16.mxu0 %v710
    %1011 = vmatpush1.bf16.msra.mxu0 %v709
    %1012 = vmatprep.subr.bf16.mxu0 %v718
    %1013 = vmatpush1.bf16.msra.mxu0 %v717
    %1014 = vmatprep.subr.bf16.mxu0 %v726
    %1015 = vmatpush1.bf16.msra.mxu0 %v725
    %1016 = vmatprep.subr.bf16.mxu0 %v734
    %1017 = vmatpush1.bf16.msra.mxu0 %v733
    %1018 = vmatprep.mubr.bf16.mxu0 %v94
    %1019 = vmatmul.mubr.bf16.gmra.mrb[0].mxu0 %v93
    %v1020 = vpop.f32.mrb[0].mxu0
    %v1021 = vadd.f32 0.0, %v1020
    %v1022 = vpop.f32.mrb[0].mxu0
    %v1023 = vadd.f32 0.0, %v1022
    %v1024 = vpop.f32.mrb[0].mxu0
    %v1025 = vpop.f32.mrb[0].mxu0
    %1026 = vdwg.mxu0
    %v1027 = vadd.f32 %v81, %v898
    %v1028 = vadd.f32 %v82, %v900
    %v1029 = vadd.f32 %v83, %v939
    %v1030 = vadd.f32 %v84, %v941
    %v1031 = vadd.f32 %v85, %v980
    %v1032 = vadd.f32 %v86, %v982
    %v1033 = vadd.f32 %v87, %v1021
    %v1034 = vadd.f32 %v88, %v1023
    %v1035 = vxor.u32 %v1027, 2147483648
    %v1036 = vxor.u32 %v1028, 2147483648
    %v1037 = vmul.f32 %v1035, 1.442695
    %v1038 = vpow.pop %v1037
    %v1039 = vmul.f32 %v1036, 1.442695
    %v1040 = vpow.pop %v1039
    %v1041 = vadd.f32 %v1038, 1.0
    %v1042 = vadd.f32 %v1040, 1.0
    %v1043 = vrcp.pop %v1041
    %v1044 = vmul.f32 1.0, %v1043
    %v1045 = vrcp.pop %v1042
    %v1046 = vmul.f32 1.0, %v1045
    %v1047 = vxor.u32 %v1029, 2147483648
    %v1048 = vxor.u32 %v1030, 2147483648
    %v1049 = vmul.f32 %v1047, 1.442695
    %v1050 = vpow.pop %v1049
    %v1051 = vmul.f32 %v1048, 1.442695
    %v1052 = vpow.pop %v1051
    %v1053 = vadd.f32 %v1050, 1.0
    %v1054 = vadd.f32 %v1052, 1.0
    %v1055 = vrcp.pop %v1053
    %v1056 = vmul.f32 1.0, %v1055
    %v1057 = vrcp.pop %v1054
    %v1058 = vmul.f32 1.0, %v1057
    %v1059 = vtanh.pop %v1031
    %v1060 = vtanh.pop %v1032
    %v1061 = vxor.u32 %v1033, 2147483648
    %v1062 = vxor.u32 %v1034, 2147483648
    %v1063 = vmul.f32 %v1061, 1.442695
    %v1064 = vpow.pop %v1063
    %v1065 = vmul.f32 %v1062, 1.442695
    %v1066 = vpow.pop %v1065
    %v1067 = vadd.f32 %v1064, 1.0
    %v1068 = vadd.f32 %v1066, 1.0
    %v1069 = vrcp.pop %v1067
    %v1070 = vmul.f32 1.0, %v1069
    %v1071 = vrcp.pop %v1068
    %v1072 = vmul.f32 1.0, %v1071
    %v1073 = vmul.f32 %v1056, %v91
    %v1074 = vmul.f32 %v1058, %v92
    %v1075 = vmul.f32 %v1044, %v1059
    %v1076 = vmul.f32 %v1046, %v1060
    %v1077 = vadd.f32 %v1073, %v1075
    %v1078 = vadd.f32 %v1074, %v1076
    %v1079 = vtanh.pop %v1077
    %v1080 = vtanh.pop %v1078
    %v1081 = vmul.f32 %v1070, %v1079
    %v1082 = vmul.f32 %v1072, %v1080
    %1083 = vst [vmem:[#allocation2] sm:$0xff] %v1081
    %1084 = vst [vmem:[#allocation2 + $0x8] sm:$0xff] %v1082
    %1085 = vst [vmem:[#allocation3] sm:$0xff] %v1077
    %1086 = vst [vmem:[#allocation3 + $0x8] sm:$0xff] %v1078
    %s1087 = smul.u32 %s73, 2
    %s1088 = smul.addr %s1087, 8
    %s1089 = scalar_lea.vmem %s4, %s1088
    %1090 = vst [vmem:[%s1089] sm:$0xff] %v1081
    %1091 = vst [vmem:[%s1089 + $0x8] sm:$0xff] %v1082
    %s1092 = ssub.s32 7, %s73
    %s1093 = smul.u32 %s1092, 8
    %s1094 = smul.addr %s1093, 8
    %s1095 = scalar_lea.vmem %s48, %s1094
    %v1096 = vld [vmem:[%s1095] sm:$0xff]
    %v1097 = vld [vmem:[%s1095 + $0x8] sm:$0xff]
    %v1098 = vld [vmem:[%s1095 + $0x10] sm:$0xff]
    %v1099 = vld [vmem:[%s1095 + $0x18] sm:$0xff]
    %v1100 = vld [vmem:[%s1095 + $0x20] sm:$0xff]
    %v1101 = vld [vmem:[%s1095 + $0x28] sm:$0xff]
    %v1102 = vld [vmem:[%s1095 + $0x30] sm:$0xff]
    %v1103 = vld [vmem:[%s1095 + $0x38] sm:$0xff]
    %v1104 = vld [vmem:[#allocation4] sm:$0xff]
    %v1105 = vld [vmem:[#allocation4 + $0x8] sm:$0xff]
    %v1106 = vld [vmem:[#allocation5] sm:$0xff]
    %v1107 = vld [vmem:[#allocation5 + $0x8] sm:$0xff]
    %v1108 = vpack.c.bf16 %v1104, %v1104
    %v1109 = vpack.c.bf16 %v1105, %v1105
    %v1110 = vld [vmem:[%s3] sm:$0xff]
    %v1111 = vld [vmem:[%s3 + $0x8] sm:$0xff]
    %v1112 = vld [vmem:[%s3 + $0x10] sm:$0xff]
    %v1113 = vld [vmem:[%s3 + $0x18] sm:$0xff]
    %v1114 = vld [vmem:[%s3 + $0x20] sm:$0xff]
    %v1115 = vld [vmem:[%s3 + $0x28] sm:$0xff]
    %v1116 = vld [vmem:[%s3 + $0x30] sm:$0xff]
    %v1117 = vld [vmem:[%s3 + $0x38] sm:$0xff]
    %v1118 = vld [vmem:[%s3 + $0x40] sm:$0xff]
    %v1119 = vld [vmem:[%s3 + $0x48] sm:$0xff]
    %v1120 = vld [vmem:[%s3 + $0x50] sm:$0xff]
    %v1121 = vld [vmem:[%s3 + $0x58] sm:$0xff]
    %v1122 = vld [vmem:[%s3 + $0x60] sm:$0xff]
    %v1123 = vld [vmem:[%s3 + $0x68] sm:$0xff]
    %v1124 = vld [vmem:[%s3 + $0x70] sm:$0xff]
    %v1125 = vld [vmem:[%s3 + $0x78] sm:$0xff]
    %v1126 = vld [vmem:[%s3 + $0x80] sm:$0xff]
    %v1127 = vld [vmem:[%s3 + $0x88] sm:$0xff]
    %v1128 = vld [vmem:[%s3 + $0x90] sm:$0xff]
    %v1129 = vld [vmem:[%s3 + $0x98] sm:$0xff]
    %v1130 = vld [vmem:[%s3 + $0xa0] sm:$0xff]
    %v1131 = vld [vmem:[%s3 + $0xa8] sm:$0xff]
    %v1132 = vld [vmem:[%s3 + $0xb0] sm:$0xff]
    %v1133 = vld [vmem:[%s3 + $0xb8] sm:$0xff]
    %v1134 = vld [vmem:[%s3 + $0xc0] sm:$0xff]
    %v1135 = vld [vmem:[%s3 + $0xc8] sm:$0xff]
    %v1136 = vld [vmem:[%s3 + $0xd0] sm:$0xff]
    %v1137 = vld [vmem:[%s3 + $0xd8] sm:$0xff]
    %v1138 = vld [vmem:[%s3 + $0xe0] sm:$0xff]
    %v1139 = vld [vmem:[%s3 + $0xe8] sm:$0xff]
    %v1140 = vld [vmem:[%s3 + $0xf0] sm:$0xff]
    %v1141 = vld [vmem:[%s3 + $0xf8] sm:$0xff]
    %v1142 = vld [vmem:[%s3 + $0x100] sm:$0xff]
    %v1143 = vld [vmem:[%s3 + $0x108] sm:$0xff]
    %v1144 = vld [vmem:[%s3 + $0x110] sm:$0xff]
    %v1145 = vld [vmem:[%s3 + $0x118] sm:$0xff]
    %v1146 = vld [vmem:[%s3 + $0x120] sm:$0xff]
    %v1147 = vld [vmem:[%s3 + $0x128] sm:$0xff]
    %v1148 = vld [vmem:[%s3 + $0x130] sm:$0xff]
    %v1149 = vld [vmem:[%s3 + $0x138] sm:$0xff]
    %v1150 = vld [vmem:[%s3 + $0x140] sm:$0xff]
    %v1151 = vld [vmem:[%s3 + $0x148] sm:$0xff]
    %v1152 = vld [vmem:[%s3 + $0x150] sm:$0xff]
    %v1153 = vld [vmem:[%s3 + $0x158] sm:$0xff]
    %v1154 = vld [vmem:[%s3 + $0x160] sm:$0xff]
    %v1155 = vld [vmem:[%s3 + $0x168] sm:$0xff]
    %v1156 = vld [vmem:[%s3 + $0x170] sm:$0xff]
    %v1157 = vld [vmem:[%s3 + $0x178] sm:$0xff]
    %v1158 = vld [vmem:[%s3 + $0x180] sm:$0xff]
    %v1159 = vld [vmem:[%s3 + $0x188] sm:$0xff]
    %v1160 = vld [vmem:[%s3 + $0x190] sm:$0xff]
    %v1161 = vld [vmem:[%s3 + $0x198] sm:$0xff]
    %v1162 = vld [vmem:[%s3 + $0x1a0] sm:$0xff]
    %v1163 = vld [vmem:[%s3 + $0x1a8] sm:$0xff]
    %v1164 = vld [vmem:[%s3 + $0x1b0] sm:$0xff]
    %v1165 = vld [vmem:[%s3 + $0x1b8] sm:$0xff]
    %v1166 = vld [vmem:[%s3 + $0x1c0] sm:$0xff]
    %v1167 = vld [vmem:[%s3 + $0x1c8] sm:$0xff]
    %v1168 = vld [vmem:[%s3 + $0x1d0] sm:$0xff]
    %v1169 = vld [vmem:[%s3 + $0x1d8] sm:$0xff]
    %v1170 = vld [vmem:[%s3 + $0x1e0] sm:$0xff]
    %v1171 = vld [vmem:[%s3 + $0x1e8] sm:$0xff]
    %v1172 = vld [vmem:[%s3 + $0x1f0] sm:$0xff]
    %v1173 = vld [vmem:[%s3 + $0x1f8] sm:$0xff]
    %v1174 = vld [vmem:[%s3 + $0x200] sm:$0xff]
    %v1175 = vld [vmem:[%s3 + $0x208] sm:$0xff]
    %v1176 = vld [vmem:[%s3 + $0x210] sm:$0xff]
    %v1177 = vld [vmem:[%s3 + $0x218] sm:$0xff]
    %v1178 = vld [vmem:[%s3 + $0x220] sm:$0xff]
    %v1179 = vld [vmem:[%s3 + $0x228] sm:$0xff]
    %v1180 = vld [vmem:[%s3 + $0x230] sm:$0xff]
    %v1181 = vld [vmem:[%s3 + $0x238] sm:$0xff]
    %v1182 = vld [vmem:[%s3 + $0x240] sm:$0xff]
    %v1183 = vld [vmem:[%s3 + $0x248] sm:$0xff]
    %v1184 = vld [vmem:[%s3 + $0x250] sm:$0xff]
    %v1185 = vld [vmem:[%s3 + $0x258] sm:$0xff]
    %v1186 = vld [vmem:[%s3 + $0x260] sm:$0xff]
    %v1187 = vld [vmem:[%s3 + $0x268] sm:$0xff]
    %v1188 = vld [vmem:[%s3 + $0x270] sm:$0xff]
    %v1189 = vld [vmem:[%s3 + $0x278] sm:$0xff]
    %v1190 = vld [vmem:[%s3 + $0x280] sm:$0xff]
    %v1191 = vld [vmem:[%s3 + $0x288] sm:$0xff]
    %v1192 = vld [vmem:[%s3 + $0x290] sm:$0xff]
    %v1193 = vld [vmem:[%s3 + $0x298] sm:$0xff]
    %v1194 = vld [vmem:[%s3 + $0x2a0] sm:$0xff]
    %v1195 = vld [vmem:[%s3 + $0x2a8] sm:$0xff]
    %v1196 = vld [vmem:[%s3 + $0x2b0] sm:$0xff]
    %v1197 = vld [vmem:[%s3 + $0x2b8] sm:$0xff]
    %v1198 = vld [vmem:[%s3 + $0x2c0] sm:$0xff]
    %v1199 = vld [vmem:[%s3 + $0x2c8] sm:$0xff]
    %v1200 = vld [vmem:[%s3 + $0x2d0] sm:$0xff]
    %v1201 = vld [vmem:[%s3 + $0x2d8] sm:$0xff]
    %v1202 = vld [vmem:[%s3 + $0x2e0] sm:$0xff]
    %v1203 = vld [vmem:[%s3 + $0x2e8] sm:$0xff]
    %v1204 = vld [vmem:[%s3 + $0x2f0] sm:$0xff]
    %v1205 = vld [vmem:[%s3 + $0x2f8] sm:$0xff]
    %v1206 = vld [vmem:[%s3 + $0x300] sm:$0xff]
    %v1207 = vld [vmem:[%s3 + $0x308] sm:$0xff]
    %v1208 = vld [vmem:[%s3 + $0x310] sm:$0xff]
    %v1209 = vld [vmem:[%s3 + $0x318] sm:$0xff]
    %v1210 = vld [vmem:[%s3 + $0x320] sm:$0xff]
    %v1211 = vld [vmem:[%s3 + $0x328] sm:$0xff]
    %v1212 = vld [vmem:[%s3 + $0x330] sm:$0xff]
    %v1213 = vld [vmem:[%s3 + $0x338] sm:$0xff]
    %v1214 = vld [vmem:[%s3 + $0x340] sm:$0xff]
    %v1215 = vld [vmem:[%s3 + $0x348] sm:$0xff]
    %v1216 = vld [vmem:[%s3 + $0x350] sm:$0xff]
    %v1217 = vld [vmem:[%s3 + $0x358] sm:$0xff]
    %v1218 = vld [vmem:[%s3 + $0x360] sm:$0xff]
    %v1219 = vld [vmem:[%s3 + $0x368] sm:$0xff]
    %v1220 = vld [vmem:[%s3 + $0x370] sm:$0xff]
    %v1221 = vld [vmem:[%s3 + $0x378] sm:$0xff]
    %v1222 = vld [vmem:[%s3 + $0x380] sm:$0xff]
    %v1223 = vld [vmem:[%s3 + $0x388] sm:$0xff]
    %v1224 = vld [vmem:[%s3 + $0x390] sm:$0xff]
    %v1225 = vld [vmem:[%s3 + $0x398] sm:$0xff]
    %v1226 = vld [vmem:[%s3 + $0x3a0] sm:$0xff]
    %v1227 = vld [vmem:[%s3 + $0x3a8] sm:$0xff]
    %v1228 = vld [vmem:[%s3 + $0x3b0] sm:$0xff]
    %v1229 = vld [vmem:[%s3 + $0x3b8] sm:$0xff]
    %v1230 = vld [vmem:[%s3 + $0x3c0] sm:$0xff]
    %v1231 = vld [vmem:[%s3 + $0x3c8] sm:$0xff]
    %v1232 = vld [vmem:[%s3 + $0x3d0] sm:$0xff]
    %v1233 = vld [vmem:[%s3 + $0x3d8] sm:$0xff]
    %v1234 = vld [vmem:[%s3 + $0x3e0] sm:$0xff]
    %v1235 = vld [vmem:[%s3 + $0x3e8] sm:$0xff]
    %v1236 = vld [vmem:[%s3 + $0x3f0] sm:$0xff]
    %v1237 = vld [vmem:[%s3 + $0x3f8] sm:$0xff]
    %v1366 = vunpack.c.l.b16 %v1110
    %v1367 = vunpack.c.h.b16 %v1110
    %v1368 = vunpack.c.l.b16 %v1111
    %v1369 = vunpack.c.h.b16 %v1111
    %v1370 = vunpack.c.l.b16 %v1112
    %v1371 = vunpack.c.h.b16 %v1112
    %v1372 = vunpack.c.l.b16 %v1113
    %v1373 = vunpack.c.h.b16 %v1113
    %v1374 = vunpack.c.l.b16 %v1114
    %v1375 = vunpack.c.h.b16 %v1114
    %v1376 = vunpack.c.l.b16 %v1115
    %v1377 = vunpack.c.h.b16 %v1115
    %v1378 = vunpack.c.l.b16 %v1116
    %v1379 = vunpack.c.h.b16 %v1116
    %v1380 = vunpack.c.l.b16 %v1117
    %v1381 = vunpack.c.h.b16 %v1117
    %v1382 = vunpack.c.l.b16 %v1118
    %v1383 = vunpack.c.h.b16 %v1118
    %v1384 = vunpack.c.l.b16 %v1119
    %v1385 = vunpack.c.h.b16 %v1119
    %v1386 = vunpack.c.l.b16 %v1120
    %v1387 = vunpack.c.h.b16 %v1120
    %v1388 = vunpack.c.l.b16 %v1121
    %v1389 = vunpack.c.h.b16 %v1121
    %v1390 = vunpack.c.l.b16 %v1122
    %v1391 = vunpack.c.h.b16 %v1122
    %v1392 = vunpack.c.l.b16 %v1123
    %v1393 = vunpack.c.h.b16 %v1123
    %v1394 = vunpack.c.l.b16 %v1124
    %v1395 = vunpack.c.h.b16 %v1124
    %v1396 = vunpack.c.l.b16 %v1125
    %v1397 = vunpack.c.h.b16 %v1125
    %v1398 = vunpack.c.l.b16 %v1126
    %v1399 = vunpack.c.h.b16 %v1126
    %v1400 = vunpack.c.l.b16 %v1127
    %v1401 = vunpack.c.h.b16 %v1127
    %v1402 = vunpack.c.l.b16 %v1128
    %v1403 = vunpack.c.h.b16 %v1128
    %v1404 = vunpack.c.l.b16 %v1129
    %v1405 = vunpack.c.h.b16 %v1129
    %v1406 = vunpack.c.l.b16 %v1130
    %v1407 = vunpack.c.h.b16 %v1130
    %v1408 = vunpack.c.l.b16 %v1131
    %v1409 = vunpack.c.h.b16 %v1131
    %v1410 = vunpack.c.l.b16 %v1132
    %v1411 = vunpack.c.h.b16 %v1132
    %v1412 = vunpack.c.l.b16 %v1133
    %v1413 = vunpack.c.h.b16 %v1133
    %v1414 = vunpack.c.l.b16 %v1134
    %v1415 = vunpack.c.h.b16 %v1134
    %v1416 = vunpack.c.l.b16 %v1135
    %v1417 = vunpack.c.h.b16 %v1135
    %v1418 = vunpack.c.l.b16 %v1136
    %v1419 = vunpack.c.h.b16 %v1136
    %v1420 = vunpack.c.l.b16 %v1137
    %v1421 = vunpack.c.h.b16 %v1137
    %v1422 = vunpack.c.l.b16 %v1138
    %v1423 = vunpack.c.h.b16 %v1138
    %v1424 = vunpack.c.l.b16 %v1139
    %v1425 = vunpack.c.h.b16 %v1139
    %v1426 = vunpack.c.l.b16 %v1140
    %v1427 = vunpack.c.h.b16 %v1140
    %v1428 = vunpack.c.l.b16 %v1141
    %v1429 = vunpack.c.h.b16 %v1141
    %v1430 = vunpack.c.l.b16 %v1142
    %v1431 = vunpack.c.h.b16 %v1142
    %v1432 = vunpack.c.l.b16 %v1143
    %v1433 = vunpack.c.h.b16 %v1143
    %v1434 = vunpack.c.l.b16 %v1144
    %v1435 = vunpack.c.h.b16 %v1144
    %v1436 = vunpack.c.l.b16 %v1145
    %v1437 = vunpack.c.h.b16 %v1145
    %v1438 = vunpack.c.l.b16 %v1146
    %v1439 = vunpack.c.h.b16 %v1146
    %v1440 = vunpack.c.l.b16 %v1147
    %v1441 = vunpack.c.h.b16 %v1147
    %v1442 = vunpack.c.l.b16 %v1148
    %v1443 = vunpack.c.h.b16 %v1148
    %v1444 = vunpack.c.l.b16 %v1149
    %v1445 = vunpack.c.h.b16 %v1149
    %v1446 = vunpack.c.l.b16 %v1150
    %v1447 = vunpack.c.h.b16 %v1150
    %v1448 = vunpack.c.l.b16 %v1151
    %v1449 = vunpack.c.h.b16 %v1151
    %v1450 = vunpack.c.l.b16 %v1152
    %v1451 = vunpack.c.h.b16 %v1152
    %v1452 = vunpack.c.l.b16 %v1153
    %v1453 = vunpack.c.h.b16 %v1153
    %v1454 = vunpack.c.l.b16 %v1154
    %v1455 = vunpack.c.h.b16 %v1154
    %v1456 = vunpack.c.l.b16 %v1155
    %v1457 = vunpack.c.h.b16 %v1155
    %v1458 = vunpack.c.l.b16 %v1156
    %v1459 = vunpack.c.h.b16 %v1156
    %v1460 = vunpack.c.l.b16 %v1157
    %v1461 = vunpack.c.h.b16 %v1157
    %v1462 = vunpack.c.l.b16 %v1158
    %v1463 = vunpack.c.h.b16 %v1158
    %v1464 = vunpack.c.l.b16 %v1159
    %v1465 = vunpack.c.h.b16 %v1159
    %v1466 = vunpack.c.l.b16 %v1160
    %v1467 = vunpack.c.h.b16 %v1160
    %v1468 = vunpack.c.l.b16 %v1161
    %v1469 = vunpack.c.h.b16 %v1161
    %v1470 = vunpack.c.l.b16 %v1162
    %v1471 = vunpack.c.h.b16 %v1162
    %v1472 = vunpack.c.l.b16 %v1163
    %v1473 = vunpack.c.h.b16 %v1163
    %v1474 = vunpack.c.l.b16 %v1164
    %v1475 = vunpack.c.h.b16 %v1164
    %v1476 = vunpack.c.l.b16 %v1165
    %v1477 = vunpack.c.h.b16 %v1165
    %v1478 = vunpack.c.l.b16 %v1166
    %v1479 = vunpack.c.h.b16 %v1166
    %v1480 = vunpack.c.l.b16 %v1167
    %v1481 = vunpack.c.h.b16 %v1167
    %v1482 = vunpack.c.l.b16 %v1168
    %v1483 = vunpack.c.h.b16 %v1168
    %v1484 = vunpack.c.l.b16 %v1169
    %v1485 = vunpack.c.h.b16 %v1169
    %v1486 = vunpack.c.l.b16 %v1170
    %v1487 = vunpack.c.h.b16 %v1170
    %v1488 = vunpack.c.l.b16 %v1171
    %v1489 = vunpack.c.h.b16 %v1171
    %v1490 = vunpack.c.l.b16 %v1172
    %v1491 = vunpack.c.h.b16 %v1172
    %v1492 = vunpack.c.l.b16 %v1173
    %v1493 = vunpack.c.h.b16 %v1173
    %v1494 = vunpack.c.l.b16 %v1174
    %v1495 = vunpack.c.h.b16 %v1174
    %v1496 = vunpack.c.l.b16 %v1175
    %v1497 = vunpack.c.h.b16 %v1175
    %v1498 = vunpack.c.l.b16 %v1176
    %v1499 = vunpack.c.h.b16 %v1176
    %v1500 = vunpack.c.l.b16 %v1177
    %v1501 = vunpack.c.h.b16 %v1177
    %v1502 = vunpack.c.l.b16 %v1178
    %v1503 = vunpack.c.h.b16 %v1178
    %v1504 = vunpack.c.l.b16 %v1179
    %v1505 = vunpack.c.h.b16 %v1179
    %v1506 = vunpack.c.l.b16 %v1180
    %v1507 = vunpack.c.h.b16 %v1180
    %v1508 = vunpack.c.l.b16 %v1181
    %v1509 = vunpack.c.h.b16 %v1181
    %v1510 = vunpack.c.l.b16 %v1182
    %v1511 = vunpack.c.h.b16 %v1182
    %v1512 = vunpack.c.l.b16 %v1183
    %v1513 = vunpack.c.h.b16 %v1183
    %v1514 = vunpack.c.l.b16 %v1184
    %v1515 = vunpack.c.h.b16 %v1184
    %v1516 = vunpack.c.l.b16 %v1185
    %v1517 = vunpack.c.h.b16 %v1185
    %v1518 = vunpack.c.l.b16 %v1186
    %v1519 = vunpack.c.h.b16 %v1186
    %v1520 = vunpack.c.l.b16 %v1187
    %v1521 = vunpack.c.h.b16 %v1187
    %v1522 = vunpack.c.l.b16 %v1188
    %v1523 = vunpack.c.h.b16 %v1188
    %v1524 = vunpack.c.l.b16 %v1189
    %v1525 = vunpack.c.h.b16 %v1189
    %v1526 = vunpack.c.l.b16 %v1190
    %v1527 = vunpack.c.h.b16 %v1190
    %v1528 = vunpack.c.l.b16 %v1191
    %v1529 = vunpack.c.h.b16 %v1191
    %v1530 = vunpack.c.l.b16 %v1192
    %v1531 = vunpack.c.h.b16 %v1192
    %v1532 = vunpack.c.l.b16 %v1193
    %v1533 = vunpack.c.h.b16 %v1193
    %v1534 = vunpack.c.l.b16 %v1194
    %v1535 = vunpack.c.h.b16 %v1194
    %v1536 = vunpack.c.l.b16 %v1195
    %v1537 = vunpack.c.h.b16 %v1195
    %v1538 = vunpack.c.l.b16 %v1196
    %v1539 = vunpack.c.h.b16 %v1196
    %v1540 = vunpack.c.l.b16 %v1197
    %v1541 = vunpack.c.h.b16 %v1197
    %v1542 = vunpack.c.l.b16 %v1198
    %v1543 = vunpack.c.h.b16 %v1198
    %v1544 = vunpack.c.l.b16 %v1199
    %v1545 = vunpack.c.h.b16 %v1199
    %v1546 = vunpack.c.l.b16 %v1200
    %v1547 = vunpack.c.h.b16 %v1200
    %v1548 = vunpack.c.l.b16 %v1201
    %v1549 = vunpack.c.h.b16 %v1201
    %v1550 = vunpack.c.l.b16 %v1202
    %v1551 = vunpack.c.h.b16 %v1202
    %v1552 = vunpack.c.l.b16 %v1203
    %v1553 = vunpack.c.h.b16 %v1203
    %v1554 = vunpack.c.l.b16 %v1204
    %v1555 = vunpack.c.h.b16 %v1204
    %v1556 = vunpack.c.l.b16 %v1205
    %v1557 = vunpack.c.h.b16 %v1205
    %v1558 = vunpack.c.l.b16 %v1206
    %v1559 = vunpack.c.h.b16 %v1206
    %v1560 = vunpack.c.l.b16 %v1207
    %v1561 = vunpack.c.h.b16 %v1207
    %v1562 = vunpack.c.l.b16 %v1208
    %v1563 = vunpack.c.h.b16 %v1208
    %v1564 = vunpack.c.l.b16 %v1209
    %v1565 = vunpack.c.h.b16 %v1209
    %v1566 = vunpack.c.l.b16 %v1210
    %v1567 = vunpack.c.h.b16 %v1210
    %v1568 = vunpack.c.l.b16 %v1211
    %v1569 = vunpack.c.h.b16 %v1211
    %v1570 = vunpack.c.l.b16 %v1212
    %v1571 = vunpack.c.h.b16 %v1212
    %v1572 = vunpack.c.l.b16 %v1213
    %v1573 = vunpack.c.h.b16 %v1213
    %v1574 = vunpack.c.l.b16 %v1214
    %v1575 = vunpack.c.h.b16 %v1214
    %v1576 = vunpack.c.l.b16 %v1215
    %v1577 = vunpack.c.h.b16 %v1215
    %v1578 = vunpack.c.l.b16 %v1216
    %v1579 = vunpack.c.h.b16 %v1216
    %v1580 = vunpack.c.l.b16 %v1217
    %v1581 = vunpack.c.h.b16 %v1217
    %v1582 = vunpack.c.l.b16 %v1218
    %v1583 = vunpack.c.h.b16 %v1218
    %v1584 = vunpack.c.l.b16 %v1219
    %v1585 = vunpack.c.h.b16 %v1219
    %v1586 = vunpack.c.l.b16 %v1220
    %v1587 = vunpack.c.h.b16 %v1220
    %v1588 = vunpack.c.l.b16 %v1221
    %v1589 = vunpack.c.h.b16 %v1221
    %v1590 = vunpack.c.l.b16 %v1222
    %v1591 = vunpack.c.h.b16 %v1222
    %v1592 = vunpack.c.l.b16 %v1223
    %v1593 = vunpack.c.h.b16 %v1223
    %v1594 = vunpack.c.l.b16 %v1224
    %v1595 = vunpack.c.h.b16 %v1224
    %v1596 = vunpack.c.l.b16 %v1225
    %v1597 = vunpack.c.h.b16 %v1225
    %v1598 = vunpack.c.l.b16 %v1226
    %v1599 = vunpack.c.h.b16 %v1226
    %v1600 = vunpack.c.l.b16 %v1227
    %v1601 = vunpack.c.h.b16 %v1227
    %v1602 = vunpack.c.l.b16 %v1228
    %v1603 = vunpack.c.h.b16 %v1228
    %v1604 = vunpack.c.l.b16 %v1229
    %v1605 = vunpack.c.h.b16 %v1229
    %v1606 = vunpack.c.l.b16 %v1230
    %v1607 = vunpack.c.h.b16 %v1230
    %v1608 = vunpack.c.l.b16 %v1231
    %v1609 = vunpack.c.h.b16 %v1231
    %v1610 = vunpack.c.l.b16 %v1232
    %v1611 = vunpack.c.h.b16 %v1232
    %v1612 = vunpack.c.l.b16 %v1233
    %v1613 = vunpack.c.h.b16 %v1233
    %v1614 = vunpack.c.l.b16 %v1234
    %v1615 = vunpack.c.h.b16 %v1234
    %v1616 = vunpack.c.l.b16 %v1235
    %v1617 = vunpack.c.h.b16 %v1235
    %v1618 = vunpack.c.l.b16 %v1236
    %v1619 = vunpack.c.h.b16 %v1236
    %v1620 = vunpack.c.l.b16 %v1237
    %v1621 = vunpack.c.h.b16 %v1237
    %v1622 = vpack.c.b16 %v1374, %v1366
    %v1623 = vpack.c.b16 %v1375, %v1367
    %v1624 = vpack.c.b16 %v1376, %v1368
    %v1625 = vpack.c.b16 %v1377, %v1369
    %v1626 = vpack.c.b16 %v1378, %v1370
    %v1627 = vpack.c.b16 %v1379, %v1371
    %v1628 = vpack.c.b16 %v1380, %v1372
    %v1629 = vpack.c.b16 %v1381, %v1373
    %v1630 = vpack.c.b16 %v1390, %v1382
    %v1631 = vpack.c.b16 %v1391, %v1383
    %v1632 = vpack.c.b16 %v1392, %v1384
    %v1633 = vpack.c.b16 %v1393, %v1385
    %v1634 = vpack.c.b16 %v1394, %v1386
    %v1635 = vpack.c.b16 %v1395, %v1387
    %v1636 = vpack.c.b16 %v1396, %v1388
    %v1637 = vpack.c.b16 %v1397, %v1389
    %v1638 = vpack.c.b16 %v1406, %v1398
    %v1639 = vpack.c.b16 %v1407, %v1399
    %v1640 = vpack.c.b16 %v1408, %v1400
    %v1641 = vpack.c.b16 %v1409, %v1401
    %v1642 = vpack.c.b16 %v1410, %v1402
    %v1643 = vpack.c.b16 %v1411, %v1403
    %v1644 = vpack.c.b16 %v1412, %v1404
    %v1645 = vpack.c.b16 %v1413, %v1405
    %v1646 = vpack.c.b16 %v1422, %v1414
    %v1647 = vpack.c.b16 %v1423, %v1415
    %v1648 = vpack.c.b16 %v1424, %v1416
    %v1649 = vpack.c.b16 %v1425, %v1417
    %v1650 = vpack.c.b16 %v1426, %v1418
    %v1651 = vpack.c.b16 %v1427, %v1419
    %v1652 = vpack.c.b16 %v1428, %v1420
    %v1653 = vpack.c.b16 %v1429, %v1421
    %v1654 = vpack.c.b16 %v1438, %v1430
    %v1655 = vpack.c.b16 %v1439, %v1431
    %v1656 = vpack.c.b16 %v1440, %v1432
    %v1657 = vpack.c.b16 %v1441, %v1433
    %v1658 = vpack.c.b16 %v1442, %v1434
    %v1659 = vpack.c.b16 %v1443, %v1435
    %v1660 = vpack.c.b16 %v1444, %v1436
    %v1661 = vpack.c.b16 %v1445, %v1437
    %v1662 = vpack.c.b16 %v1454, %v1446
    %v1663 = vpack.c.b16 %v1455, %v1447
    %v1664 = vpack.c.b16 %v1456, %v1448
    %v1665 = vpack.c.b16 %v1457, %v1449
    %v1666 = vpack.c.b16 %v1458, %v1450
    %v1667 = vpack.c.b16 %v1459, %v1451
    %v1668 = vpack.c.b16 %v1460, %v1452
    %v1669 = vpack.c.b16 %v1461, %v1453
    %v1670 = vpack.c.b16 %v1470, %v1462
    %v1671 = vpack.c.b16 %v1471, %v1463
    %v1672 = vpack.c.b16 %v1472, %v1464
    %v1673 = vpack.c.b16 %v1473, %v1465
    %v1674 = vpack.c.b16 %v1474, %v1466
    %v1675 = vpack.c.b16 %v1475, %v1467
    %v1676 = vpack.c.b16 %v1476, %v1468
    %v1677 = vpack.c.b16 %v1477, %v1469
    %v1678 = vpack.c.b16 %v1486, %v1478
    %v1679 = vpack.c.b16 %v1487, %v1479
    %v1680 = vpack.c.b16 %v1488, %v1480
    %v1681 = vpack.c.b16 %v1489, %v1481
    %v1682 = vpack.c.b16 %v1490, %v1482
    %v1683 = vpack.c.b16 %v1491, %v1483
    %v1684 = vpack.c.b16 %v1492, %v1484
    %v1685 = vpack.c.b16 %v1493, %v1485
    %v1686 = vpack.c.b16 %v1502, %v1494
    %v1687 = vpack.c.b16 %v1503, %v1495
    %v1688 = vpack.c.b16 %v1504, %v1496
    %v1689 = vpack.c.b16 %v1505, %v1497
    %v1690 = vpack.c.b16 %v1506, %v1498
    %v1691 = vpack.c.b16 %v1507, %v1499
    %v1692 = vpack.c.b16 %v1508, %v1500
    %v1693 = vpack.c.b16 %v1509, %v1501
    %v1694 = vpack.c.b16 %v1518, %v1510
    %v1695 = vpack.c.b16 %v1519, %v1511
    %v1696 = vpack.c.b16 %v1520, %v1512
    %v1697 = vpack.c.b16 %v1521, %v1513
    %v1698 = vpack.c.b16 %v1522, %v1514
    %v1699 = vpack.c.b16 %v1523, %v1515
    %v1700 = vpack.c.b16 %v1524, %v1516
    %v1701 = vpack.c.b16 %v1525, %v1517
    %v1702 = vpack.c.b16 %v1534, %v1526
    %v1703 = vpack.c.b16 %v1535, %v1527
    %v1704 = vpack.c.b16 %v1536, %v1528
    %v1705 = vpack.c.b16 %v1537, %v1529
    %v1706 = vpack.c.b16 %v1538, %v1530
    %v1707 = vpack.c.b16 %v1539, %v1531
    %v1708 = vpack.c.b16 %v1540, %v1532
    %v1709 = vpack.c.b16 %v1541, %v1533
    %v1710 = vpack.c.b16 %v1550, %v1542
    %v1711 = vpack.c.b16 %v1551, %v1543
    %v1712 = vpack.c.b16 %v1552, %v1544
    %v1713 = vpack.c.b16 %v1553, %v1545
    %v1714 = vpack.c.b16 %v1554, %v1546
    %v1715 = vpack.c.b16 %v1555, %v1547
    %v1716 = vpack.c.b16 %v1556, %v1548
    %v1717 = vpack.c.b16 %v1557, %v1549
    %v1718 = vpack.c.b16 %v1566, %v1558
    %v1719 = vpack.c.b16 %v1567, %v1559
    %v1720 = vpack.c.b16 %v1568, %v1560
    %v1721 = vpack.c.b16 %v1569, %v1561
    %v1722 = vpack.c.b16 %v1570, %v1562
    %v1723 = vpack.c.b16 %v1571, %v1563
    %v1724 = vpack.c.b16 %v1572, %v1564
    %v1725 = vpack.c.b16 %v1573, %v1565
    %v1726 = vpack.c.b16 %v1582, %v1574
    %v1727 = vpack.c.b16 %v1583, %v1575
    %v1728 = vpack.c.b16 %v1584, %v1576
    %v1729 = vpack.c.b16 %v1585, %v1577
    %v1730 = vpack.c.b16 %v1586, %v1578
    %v1731 = vpack.c.b16 %v1587, %v1579
    %v1732 = vpack.c.b16 %v1588, %v1580
    %v1733 = vpack.c.b16 %v1589, %v1581
    %v1734 = vpack.c.b16 %v1598, %v1590
    %v1735 = vpack.c.b16 %v1599, %v1591
    %v1736 = vpack.c.b16 %v1600, %v1592
    %v1737 = vpack.c.b16 %v1601, %v1593
    %v1738 = vpack.c.b16 %v1602, %v1594
    %v1739 = vpack.c.b16 %v1603, %v1595
    %v1740 = vpack.c.b16 %v1604, %v1596
    %v1741 = vpack.c.b16 %v1605, %v1597
    %v1742 = vpack.c.b16 %v1614, %v1606
    %v1743 = vpack.c.b16 %v1615, %v1607
    %v1744 = vpack.c.b16 %v1616, %v1608
    %v1745 = vpack.c.b16 %v1617, %v1609
    %v1746 = vpack.c.b16 %v1618, %v1610
    %v1747 = vpack.c.b16 %v1619, %v1611
    %v1748 = vpack.c.b16 %v1620, %v1612
    %v1749 = vpack.c.b16 %v1621, %v1613
    %1878 = vmatprep.subr.bf16.mxu0 %v1623
    %1879 = vmatpush1.bf16.msra.mxu0 %v1622
    %1880 = vmatprep.subr.bf16.mxu0 %v1631
    %1881 = vmatpush1.bf16.msra.mxu0 %v1630
    %1882 = vmatprep.subr.bf16.mxu0 %v1639
    %1883 = vmatpush1.bf16.msra.mxu0 %v1638
    %1884 = vmatprep.subr.bf16.mxu0 %v1647
    %1885 = vmatpush1.bf16.msra.mxu0 %v1646
    %1886 = vmatprep.subr.bf16.mxu0 %v1655
    %1887 = vmatpush1.bf16.msra.mxu0 %v1654
    %1888 = vmatprep.subr.bf16.mxu0 %v1663
    %1889 = vmatpush1.bf16.msra.mxu0 %v1662
    %1890 = vmatprep.subr.bf16.mxu0 %v1671
    %1891 = vmatpush1.bf16.msra.mxu0 %v1670
    %1892 = vmatprep.subr.bf16.mxu0 %v1679
    %1893 = vmatpush1.bf16.msra.mxu0 %v1678
    %1894 = vmatprep.subr.bf16.mxu0 %v1687
    %1895 = vmatpush1.bf16.msra.mxu0 %v1686
    %1896 = vmatprep.subr.bf16.mxu0 %v1695
    %1897 = vmatpush1.bf16.msra.mxu0 %v1694
    %1898 = vmatprep.subr.bf16.mxu0 %v1703
    %1899 = vmatpush1.bf16.msra.mxu0 %v1702
    %1900 = vmatprep.subr.bf16.mxu0 %v1711
    %1901 = vmatpush1.bf16.msra.mxu0 %v1710
    %1902 = vmatprep.subr.bf16.mxu0 %v1719
    %1903 = vmatpush1.bf16.msra.mxu0 %v1718
    %1904 = vmatprep.subr.bf16.mxu0 %v1727
    %1905 = vmatpush1.bf16.msra.mxu0 %v1726
    %1906 = vmatprep.subr.bf16.mxu0 %v1735
    %1907 = vmatpush1.bf16.msra.mxu0 %v1734
    %1908 = vmatprep.subr.bf16.mxu0 %v1743
    %1909 = vmatpush1.bf16.msra.mxu0 %v1742
    %1910 = vmatprep.mubr.bf16.mxu0 %v1109
    %1911 = vmatmul.mubr.bf16.gmra.mrb[0].mxu0 %v1108
    %v1912 = vpop.f32.mrb[0].mxu0
    %v1913 = vadd.f32 0.0, %v1912
    %v1914 = vpop.f32.mrb[0].mxu0
    %v1915 = vadd.f32 0.0, %v1914
    %v1916 = vpop.f32.mrb[0].mxu0
    %v1917 = vpop.f32.mrb[0].mxu0
    %1918 = vdwg.mxu0
    %1919 = vmatprep.subr.bf16.mxu0 %v1625
    %1920 = vmatpush1.bf16.msra.mxu0 %v1624
    %1921 = vmatprep.subr.bf16.mxu0 %v1633
    %1922 = vmatpush1.bf16.msra.mxu0 %v1632
    %1923 = vmatprep.subr.bf16.mxu0 %v1641
    %1924 = vmatpush1.bf16.msra.mxu0 %v1640
    %1925 = vmatprep.subr.bf16.mxu0 %v1649
    %1926 = vmatpush1.bf16.msra.mxu0 %v1648
    %1927 = vmatprep.subr.bf16.mxu0 %v1657
    %1928 = vmatpush1.bf16.msra.mxu0 %v1656
    %1929 = vmatprep.subr.bf16.mxu0 %v1665
    %1930 = vmatpush1.bf16.msra.mxu0 %v1664
    %1931 = vmatprep.subr.bf16.mxu0 %v1673
    %1932 = vmatpush1.bf16.msra.mxu0 %v1672
    %1933 = vmatprep.subr.bf16.mxu0 %v1681
    %1934 = vmatpush1.bf16.msra.mxu0 %v1680
    %1935 = vmatprep.subr.bf16.mxu0 %v1689
    %1936 = vmatpush1.bf16.msra.mxu0 %v1688
    %1937 = vmatprep.subr.bf16.mxu0 %v1697
    %1938 = vmatpush1.bf16.msra.mxu0 %v1696
    %1939 = vmatprep.subr.bf16.mxu0 %v1705
    %1940 = vmatpush1.bf16.msra.mxu0 %v1704
    %1941 = vmatprep.subr.bf16.mxu0 %v1713
    %1942 = vmatpush1.bf16.msra.mxu0 %v1712
    %1943 = vmatprep.subr.bf16.mxu0 %v1721
    %1944 = vmatpush1.bf16.msra.mxu0 %v1720
    %1945 = vmatprep.subr.bf16.mxu0 %v1729
    %1946 = vmatpush1.bf16.msra.mxu0 %v1728
    %1947 = vmatprep.subr.bf16.mxu0 %v1737
    %1948 = vmatpush1.bf16.msra.mxu0 %v1736
    %1949 = vmatprep.subr.bf16.mxu0 %v1745
    %1950 = vmatpush1.bf16.msra.mxu0 %v1744
    %1951 = vmatprep.mubr.bf16.mxu0 %v1109
    %1952 = vmatmul.mubr.bf16.gmra.mrb[0].mxu0 %v1108
    %v1953 = vpop.f32.mrb[0].mxu0
    %v1954 = vadd.f32 0.0, %v1953
    %v1955 = vpop.f32.mrb[0].mxu0
    %v1956 = vadd.f32 0.0, %v1955
    %v1957 = vpop.f32.mrb[0].mxu0
    %v1958 = vpop.f32.mrb[0].mxu0
    %1959 = vdwg.mxu0
    %1960 = vmatprep.subr.bf16.mxu0 %v1627
    %1961 = vmatpush1.bf16.msra.mxu0 %v1626
    %1962 = vmatprep.subr.bf16.mxu0 %v1635
    %1963 = vmatpush1.bf16.msra.mxu0 %v1634
    %1964 = vmatprep.subr.bf16.mxu0 %v1643
    %1965 = vmatpush1.bf16.msra.mxu0 %v1642
    %1966 = vmatprep.subr.bf16.mxu0 %v1651
    %1967 = vmatpush1.bf16.msra.mxu0 %v1650
    %1968 = vmatprep.subr.bf16.mxu0 %v1659
    %1969 = vmatpush1.bf16.msra.mxu0 %v1658
    %1970 = vmatprep.subr.bf16.mxu0 %v1667
    %1971 = vmatpush1.bf16.msra.mxu0 %v1666
    %1972 = vmatprep.subr.bf16.mxu0 %v1675
    %1973 = vmatpush1.bf16.msra.mxu0 %v1674
    %1974 = vmatprep.subr.bf16.mxu0 %v1683
    %1975 = vmatpush1.bf16.msra.mxu0 %v1682
    %1976 = vmatprep.subr.bf16.mxu0 %v1691
    %1977 = vmatpush1.bf16.msra.mxu0 %v1690
    %1978 = vmatprep.subr.bf16.mxu0 %v1699
    %1979 = vmatpush1.bf16.msra.mxu0 %v1698
    %1980 = vmatprep.subr.bf16.mxu0 %v1707
    %1981 = vmatpush1.bf16.msra.mxu0 %v1706
    %1982 = vmatprep.subr.bf16.mxu0 %v1715
    %1983 = vmatpush1.bf16.msra.mxu0 %v1714
    %1984 = vmatprep.subr.bf16.mxu0 %v1723
    %1985 = vmatpush1.bf16.msra.mxu0 %v1722
    %1986 = vmatprep.subr.bf16.mxu0 %v1731
    %1987 = vmatpush1.bf16.msra.mxu0 %v1730
    %1988 = vmatprep.subr.bf16.mxu0 %v1739
    %1989 = vmatpush1.bf16.msra.mxu0 %v1738
    %1990 = vmatprep.subr.bf16.mxu0 %v1747
    %1991 = vmatpush1.bf16.msra.mxu0 %v1746
    %1992 = vmatprep.mubr.bf16.mxu0 %v1109
    %1993 = vmatmul.mubr.bf16.gmra.mrb[0].mxu0 %v1108
    %v1994 = vpop.f32.mrb[0].mxu0
    %v1995 = vadd.f32 0.0, %v1994
    %v1996 = vpop.f32.mrb[0].mxu0
    %v1997 = vadd.f32 0.0, %v1996
    %v1998 = vpop.f32.mrb[0].mxu0
    %v1999 = vpop.f32.mrb[0].mxu0
    %2000 = vdwg.mxu0
    %2001 = vmatprep.subr.bf16.mxu0 %v1629
    %2002 = vmatpush1.bf16.msra.mxu0 %v1628
    %2003 = vmatprep.subr.bf16.mxu0 %v1637
    %2004 = vmatpush1.bf16.msra.mxu0 %v1636
    %2005 = vmatprep.subr.bf16.mxu0 %v1645
    %2006 = vmatpush1.bf16.msra.mxu0 %v1644
    %2007 = vmatprep.subr.bf16.mxu0 %v1653
    %2008 = vmatpush1.bf16.msra.mxu0 %v1652
    %2009 = vmatprep.subr.bf16.mxu0 %v1661
    %2010 = vmatpush1.bf16.msra.mxu0 %v1660
    %2011 = vmatprep.subr.bf16.mxu0 %v1669
    %2012 = vmatpush1.bf16.msra.mxu0 %v1668
    %2013 = vmatprep.subr.bf16.mxu0 %v1677
    %2014 = vmatpush1.bf16.msra.mxu0 %v1676
    %2015 = vmatprep.subr.bf16.mxu0 %v1685
    %2016 = vmatpush1.bf16.msra.mxu0 %v1684
    %2017 = vmatprep.subr.bf16.mxu0 %v1693
    %2018 = vmatpush1.bf16.msra.mxu0 %v1692
    %2019 = vmatprep.subr.bf16.mxu0 %v1701
    %2020 = vmatpush1.bf16.msra.mxu0 %v1700
    %2021 = vmatprep.subr.bf16.mxu0 %v1709
    %2022 = vmatpush1.bf16.msra.mxu0 %v1708
    %2023 = vmatprep.subr.bf16.mxu0 %v1717
    %2024 = vmatpush1.bf16.msra.mxu0 %v1716
    %2025 = vmatprep.subr.bf16.mxu0 %v1725
    %2026 = vmatpush1.bf16.msra.mxu0 %v1724
    %2027 = vmatprep.subr.bf16.mxu0 %v1733
    %2028 = vmatpush1.bf16.msra.mxu0 %v1732
    %2029 = vmatprep.subr.bf16.mxu0 %v1741
    %2030 = vmatpush1.bf16.msra.mxu0 %v1740
    %2031 = vmatprep.subr.bf16.mxu0 %v1749
    %2032 = vmatpush1.bf16.msra.mxu0 %v1748
    %2033 = vmatprep.mubr.bf16.mxu0 %v1109
    %2034 = vmatmul.mubr.bf16.gmra.mrb[0].mxu0 %v1108
    %v2035 = vpop.f32.mrb[0].mxu0
    %v2036 = vadd.f32 0.0, %v2035
    %v2037 = vpop.f32.mrb[0].mxu0
    %v2038 = vadd.f32 0.0, %v2037
    %v2039 = vpop.f32.mrb[0].mxu0
    %v2040 = vpop.f32.mrb[0].mxu0
    %2041 = vdwg.mxu0
    %v2042 = vadd.f32 %v1096, %v1913
    %v2043 = vadd.f32 %v1097, %v1915
    %v2044 = vadd.f32 %v1098, %v1954
    %v2045 = vadd.f32 %v1099, %v1956
    %v2046 = vadd.f32 %v1100, %v1995
    %v2047 = vadd.f32 %v1101, %v1997
    %v2048 = vadd.f32 %v1102, %v2036
    %v2049 = vadd.f32 %v1103, %v2038
    %v2050 = vxor.u32 %v2042, 2147483648
    %v2051 = vxor.u32 %v2043, 2147483648
    %v2052 = vmul.f32 %v2050, 1.442695
    %v2053 = vpow.pop %v2052
    %v2054 = vmul.f32 %v2051, 1.442695
    %v2055 = vpow.pop %v2054
    %v2056 = vadd.f32 %v2053, 1.0
    %v2057 = vadd.f32 %v2055, 1.0
    %v2058 = vrcp.pop %v2056
    %v2059 = vmul.f32 1.0, %v2058
    %v2060 = vrcp.pop %v2057
    %v2061 = vmul.f32 1.0, %v2060
    %v2062 = vxor.u32 %v2044, 2147483648
    %v2063 = vxor.u32 %v2045, 2147483648
    %v2064 = vmul.f32 %v2062, 1.442695
    %v2065 = vpow.pop %v2064
    %v2066 = vmul.f32 %v2063, 1.442695
    %v2067 = vpow.pop %v2066
    %v2068 = vadd.f32 %v2065, 1.0
    %v2069 = vadd.f32 %v2067, 1.0
    %v2070 = vrcp.pop %v2068
    %v2071 = vmul.f32 1.0, %v2070
    %v2072 = vrcp.pop %v2069
    %v2073 = vmul.f32 1.0, %v2072
    %v2074 = vtanh.pop %v2046
    %v2075 = vtanh.pop %v2047
    %v2076 = vxor.u32 %v2048, 2147483648
    %v2077 = vxor.u32 %v2049, 2147483648
    %v2078 = vmul.f32 %v2076, 1.442695
    %v2079 = vpow.pop %v2078
    %v2080 = vmul.f32 %v2077, 1.442695
    %v2081 = vpow.pop %v2080
    %v2082 = vadd.f32 %v2079, 1.0
    %v2083 = vadd.f32 %v2081, 1.0
    %v2084 = vrcp.pop %v2082
    %v2085 = vmul.f32 1.0, %v2084
    %v2086 = vrcp.pop %v2083
    %v2087 = vmul.f32 1.0, %v2086
    %v2088 = vmul.f32 %v2071, %v1106
    %v2089 = vmul.f32 %v2073, %v1107
    %v2090 = vmul.f32 %v2059, %v2074
    %v2091 = vmul.f32 %v2061, %v2075
    %v2092 = vadd.f32 %v2088, %v2090
    %v2093 = vadd.f32 %v2089, %v2091
    %v2094 = vtanh.pop %v2092
    %v2095 = vtanh.pop %v2093
    %v2096 = vmul.f32 %v2085, %v2094
    %v2097 = vmul.f32 %v2087, %v2095
    %2098 = vst [vmem:[#allocation4] sm:$0xff] %v2096
    %2099 = vst [vmem:[#allocation4 + $0x8] sm:$0xff] %v2097
    %2100 = vst [vmem:[#allocation5] sm:$0xff] %v2092
    %2101 = vst [vmem:[#allocation5 + $0x8] sm:$0xff] %v2093
    %s2102 = smul.u32 %s1092, 2
    %s2103 = smul.addr %s2102, 8
    %s2104 = scalar_lea.vmem %s57, %s2103
    %2105 = vst [vmem:[%s2104] sm:$0xff] %v2096
    %2106 = vst [vmem:[%s2104 + $0x8] sm:$0xff] %v2097
  $region26: #{brnn_forward.3} parent=0 // loop_footer
    %s77 = sadd.s32 1, %s73
  $region27: #{brnn_forward.3} parent=0 // loop_footer_branch
    %72 = sbr.rel target = $region23
  $region28: #{brnn_forward.3} parent=0 // loop_exit
    _
  %s2107 = ssub.s32 0, 0
  %s2108 = smul.u32 8, %s2107
  %p2109 = scmp.lt.s32.totalorder %s2108, 7
  %s2110 = scalar_select %p2109, %s2108, 7
  %s2111 = smul.addr %s2110, 2
  %s2112 = smul.addr %s2111, 8
  %s2113 = scalar_lea.vmem %s5, %s2112
  // Predicated region
  $region29: #{brnn_forward.3} parent=0 // pred_check
    _
  $region30: #{brnn_forward.3} parent=0 // pred_check_branch
    %2115 = sbr.rel (0) target = $region32
  $region31: #{brnn_forward.3} parent=0 // pred_region
    _
  $region32: #{brnn_forward.3} parent=0 // pred_fallthru
    _
  // Predicated region
  $region33: #{brnn_forward.3} parent=0 // pred_check
    _
  $region34: #{brnn_forward.3} parent=0 // pred_check_branch
    %2117 = sbr.rel (0) target = $region36
  $region35: #{brnn_forward.3} parent=0 // pred_region
    %s2118 = ssub.s32 0, 0
    %s2119 = smul.u32 8, %s2118
  $region36: #{brnn_forward.3} parent=0 // pred_fallthru
    _
  // Predicated region
  $region37: #{brnn_forward.3} parent=0 // pred_check
    _
  $region38: #{brnn_forward.3} parent=0 // pred_check_branch
    %2121 = sbr.rel (0) target = $region40
  $region39: #{brnn_forward.3} parent=0 // pred_region
    _
  $region40: #{brnn_forward.3} parent=0 // pred_fallthru
    _
  // Predicated region
  $region41: #{brnn_forward.3} parent=0 // pred_check
    _
  $region42: #{brnn_forward.3} parent=0 // pred_check_branch
    %2123 = sbr.rel (0) target = $region44
  $region43: #{brnn_forward.3} parent=0 // pred_region
    %s2124 = ssub.s32 0, 0
    %s2125 = smul.u32 8, %s2124
    %p2126 = scmp.lt.s32.totalorder %s2125, 7
    %s2127 = scalar_select %p2126, %s2125, 7
    %s2128 = smul.addr %s2127, 2
    %s2129 = smul.addr %s2128, 8
    %s2130 = scalar_lea.vmem %s5, %s2129
  $region44: #{brnn_forward.3} parent=0 // pred_fallthru
    _

</llo_original>
